<compile_context>
chip_gen: v5e
topology: v5e:2x2
jax: 0.10.0
libtpu: 0.0.40
codegen_flags: <defaults>
</compile_context>

<pallas_src>
import numpy as np
import jax
import jax.numpy as jnp
from jax.experimental import pallas as pl
from jax.experimental.pallas import tpu as pltpu


_LANES = 128  # padded channel width (TPU lane dim)


def _round_up(x, m):
    return (x + m - 1) // m * m


def _elu(a):
    # ELU(alpha=1).  exp only ever sees non-positive values -> no inf on the
    # dead branch, exact 0 for padded lanes/rows.
    return jnp.where(a > 0, a, jnp.exp(jnp.minimum(a, 0.0)) - 1.0)


def _gather_matrix(ih, iw, k, s, m_in_pad, m_out_pad):
    """One-hot row-gather matrix expressing im2col of a [ih*iw, C] activation.

    Row layout is tap-major: row = t * m_out_pad + (oh*ow_out + ow), so a
    contiguous static slice of the gathered result isolates one tap.  Padded
    input rows are never referenced, padded output rows stay all-zero.
    """
    oh = (ih - k) // s + 1
    ow = (iw - k) // s + 1
    g = np.zeros((k * k * m_out_pad, m_in_pad), np.float32)
    for i in range(k):
        for j in range(k):
            t = i * k + j
            for r in range(oh):
                for c in range(ow):
                    src = (s * r + i) * iw + (s * c + j)
                    g[t * m_out_pad + r * ow + c, src] = 1.0
    return g


# ----------------------------------------------------------------------------
# Fused kernel: one batch element, all three Conv2d+ELU layers, all in VMEM.
#   p1_ref : [1, M1P, K1]    bf16  layer-1 im2col patches (rows=(oh1,ow1))
#   w1_ref : [K1, 128]       bf16  layer-1 weight, (i,j,cin)-major rows
#   g2_ref : [T2*M2P, M1P]   bf16  one-hot row gather (im2col) for layer 2
#   w2_ref : [T2, 128, 128]  bf16  layer-2 per-tap weights [cin, cout]
#   g3_ref : [T3*M3P, M2P]   bf16  one-hot row gather for layer 3
#   w3_ref : [T3, 128, 128]  bf16  layer-3 per-tap weights [cin, cout]
#   b_ref  : [3, 128]        f32   biases (row l = layer l+1), zero padded
#   o_ref  : [1, M3P, 128]   f32   layer-3 activations (rows=(oh3,ow3))
# ----------------------------------------------------------------------------
def _fused_atari_kernel(p1_ref, w1_ref, g2_ref, w2_ref, g3_ref, w3_ref,
                        b_ref, o_ref):
    f32, bf16 = jnp.float32, jnp.bfloat16

    # ---- layer 1: patches @ W1 (bf16 in, f32 acc), bias, ELU ---------------
    acc1 = jnp.dot(p1_ref[0], w1_ref[...], preferred_element_type=f32)
    act1 = _elu(acc1 + b_ref[0:1, :])                        # [M1P, 128] f32

    # ---- layer 2: one-hot gather (im2col) + per-tap matmuls ----------------
    t2 = w2_ref.shape[0]
    m2 = g2_ref.shape[0] // t2
    pg2 = jnp.dot(g2_ref[...], act1.astype(bf16),
                  preferred_element_type=f32)                # [T2*M2P, 128]
    acc2 = None
    for t in range(t2):                                      # unrolled taps
        lhs = pg2[t * m2:(t + 1) * m2, :].astype(bf16)       # vreg-aligned
        part = jnp.dot(lhs, w2_ref[t], preferred_element_type=f32)
        acc2 = part if acc2 is None else acc2 + part
    act2 = _elu(acc2 + b_ref[1:2, :])                        # [M2P, 128] f32

    # ---- layer 3 ------------------------------------------------------------
    t3 = w3_ref.shape[0]
    m3 = g3_ref.shape[0] // t3
    pg3 = jnp.dot(g3_ref[...], act2.astype(bf16),
                  preferred_element_type=f32)                # [T3*M3P, 128]
    acc3 = None
    for t in range(t3):                                      # unrolled taps
        lhs = pg3[t * m3:(t + 1) * m3, :].astype(bf16)       # vreg-aligned
        part = jnp.dot(lhs, w3_ref[t], preferred_element_type=f32)
        acc3 = part if acc3 is None else acc3 + part
    o_ref[0] = _elu(acc3 + b_ref[2:3, :])


# ----------------------------------------------------------------------------
# Builder: hoist all static preprocessing (weight flatten/pad, gather
# matrices) out of the per-step path and return a jitted forward(x).
# ----------------------------------------------------------------------------
def make_atari_convnet_forward(params, frame_size, nb_channels):
    (w1, b1), (w2, b2), (w3, b3) = params
    H, W = frame_size
    ks, ss = (8, 4, 3), (4, 2, 1)

    ohs, ows = [H], [W]
    for k, s in zip(ks, ss):
        ohs.append((ohs[-1] - k) // s + 1)
        ows.append((ows[-1] - k) // s + 1)
    oh1, oh2, oh3 = ohs[1:]
    ow1, ow2, ow3 = ows[1:]
    assert oh3 >= 1 and ow3 >= 1, "frame too small for the conv stack"

    c1, c2, c3 = 32, 64, 64
    m1, m2, m3 = oh1 * ow1, oh2 * ow2, oh3 * ow3
    m1p, m2p, m3p = _round_up(m1, 8), _round_up(m2, 8), _round_up(m3, 8)
    k1 = ks[0] * ks[0] * nb_channels

    # --- static operands: kept VMEM-resident by the kernel ------------------
    w1m = jnp.transpose(w1, (2, 3, 1, 0)).reshape(k1, c1)     # (i,j,cin)-major
    w1m = jnp.pad(w1m, ((0, 0), (0, _LANES - c1))).astype(jnp.bfloat16)

    def tap_w(w, cin, cout):
        k = w.shape[-1]
        wt = jnp.transpose(w, (2, 3, 1, 0)).reshape(k * k, cin, cout)
        return jnp.pad(
            wt, ((0, 0), (0, _LANES - cin), (0, _LANES - cout))
        ).astype(jnp.bfloat16)

    w2t = tap_w(w2, c1, c2)                                   # [16, 128, 128]
    w3t = tap_w(w3, c2, c3)                                   # [ 9, 128, 128]

    bias = np.zeros((3, _LANES), np.float32)
    bias[0, :c1] = np.asarray(b1)
    bias[1, :c2] = np.asarray(b2)
    bias[2, :c3] = np.asarray(b3)
    bias = jnp.asarray(bias)

    g2 = jnp.asarray(_gather_matrix(oh1, ow1, ks[1], ss[1], m1p, m2p),
                     jnp.bfloat16)                            # [16*m2p, m1p]
    g3 = jnp.asarray(_gather_matrix(oh2, ow2, ks[2], ss[2], m2p, m3p),
                     jnp.bfloat16)                            # [ 9*m3p, m2p]

    def forward(x):
        B = x.shape[0]
        # Layer-1 im2col on the raw input: NHWC strided slices, (i,j,cin)-major
        # feature order.  Cast to bf16 FIRST so the slice/concat/pad glue moves
        # half the bytes; MXU operands are bf16 anyway so results are
        # unchanged.  This (plus the tiny final NCHW transpose) is the only
        # XLA glue left outside the fused kernel.
        xh = jnp.transpose(x, (0, 2, 3, 1)).astype(jnp.bfloat16)
        s0, k0 = ss[0], ks[0]
        cols = [xh[:, i:i + s0 * oh1:s0, j:j + s0 * ow1:s0, :]
                for i in range(k0) for j in range(k0)]
        p1 = jnp.concatenate(cols, axis=-1).reshape(B, m1, k1)
        p1 = jnp.pad(p1, ((0, 0), (0, m1p - m1), (0, 0)))

        out = pl.pallas_call(
            _fused_atari_kernel,
            out_shape=jax.ShapeDtypeStruct((B, m3p, _LANES), jnp.float32),
            grid_spec=pltpu.PrefetchScalarGridSpec(
                num_scalar_prefetch=0,
                grid=(B,),                          # batch elements independent
                in_specs=[
                    pl.BlockSpec((1, m1p, k1), lambda b: (b, 0, 0)),
                    pl.BlockSpec(w1m.shape, lambda b: (0, 0)),
                    pl.BlockSpec(g2.shape, lambda b: (0, 0)),
                    pl.BlockSpec(w2t.shape, lambda b: (0, 0, 0)),
                    pl.BlockSpec(g3.shape, lambda b: (0, 0)),
                    pl.BlockSpec(w3t.shape, lambda b: (0, 0, 0)),
                    pl.BlockSpec(bias.shape, lambda b: (0, 0)),
                ],
                out_specs=pl.BlockSpec((1, m3p, _LANES), lambda b: (b, 0, 0)),
            ),
            compiler_params=pltpu.CompilerParams(
                dimension_semantics=("parallel",)),  # v7x: both TCs get work
        )(p1, w1m, g2, w2t, g3, w3t, bias)

        y = out[:, :m3, :c3].reshape(B, oh3, ow3, c3)
        return jnp.transpose(y, (0, 3, 1, 2))        # NCHW, matching PyTorch
    return jax.jit(forward)


def init_params(key, nb_channels):
    ks = jax.random.split(key, 6)
    scale = 0.05
    w1 = scale * jax.random.normal(ks[0], (32, nb_channels, 8, 8), jnp.float32)
    b1 = scale * jax.random.normal(ks[1], (32,), jnp.float32)
    w2 = scale * jax.random.normal(ks[2], (64, 32, 4, 4), jnp.float32)
    b2 = scale * jax.random.normal(ks[3], (64,), jnp.float32)
    w3 = scale * jax.random.normal(ks[4], (64, 64, 3, 3), jnp.float32)
    b3 = scale * jax.random.normal(ks[5], (64,), jnp.float32)
    return ((w1, b1), (w2, b2), (w3, b3))


# Pure-JAX reference (lax conv, NCHW/OIHW like PyTorch) for correctness check.
def _reference_forward(x, params):
    def conv_elu(x, w, b, stride):
        y = jax.lax.conv_general_dilated(
            x, w, window_strides=(stride, stride), padding="VALID",
            dimension_numbers=("NCHW", "OIHW", "NCHW"))
        y = y + b[None, :, None, None]
        return jnp.where(y > 0, y, jnp.exp(jnp.minimum(y, 0.0)) - 1.0)
    (w1, b1), (w2, b2), (w3, b3) = params
    x = conv_elu(x, w1, b1, 4)
    x = conv_elu(x, w2, b2, 2)
    x = conv_elu(x, w3, b3, 1)
    return x


if __name__ == "__main__":
    key = jax.random.PRNGKey(0)
    k_in, k_par = jax.random.split(key)

    # Small shapes consistent with the module: the k=8/4/3, s=4/2/1 stack needs
    # frames of at least 36x36; use 48x48, nb_channels=4, batch=2.
    # Spatial: 48 -> 11 -> 4 -> 2, so output is [B, 64, 2, 2].
    B, C, H, W = 2, 4, 48, 48
    x = jax.random.normal(k_in, (B, C, H, W), jnp.float32)
    params = init_params(k_par, C)

    forward = make_atari_convnet_forward(params, (H, W), C)
    out = jax.block_until_ready(forward(x))
    assert out.shape == (B, 64, 2, 2), out.shape

    ref = jax.block_until_ready(_reference_forward(x, params))
    # bf16 MXU operands (per v6e/v7x guidance) vs the f32 lax.conv reference
    # => loosened tolerance; still tight enough to catch any indexing/weight-
    # ordering bug (those produce O(1) errors).
    max_err = float(jnp.max(jnp.abs(out - ref)))
    assert jnp.allclose(out, ref, atol=5e-2, rtol=5e-2), max_err

    print("KERNEL_OK")
</pallas_src>

<mosaic_0001>
module attributes {stable_mosaic.version = 11 : i64} {
  func.func @_fused_atari_kernel(%arg0: i32, %arg1: memref<1x128x256xbf16, #tpu.memory_space<vmem>>, %arg2: memref<256x128xbf16, #tpu.memory_space<vmem>>, %arg3: memref<256x128xbf16, #tpu.memory_space<vmem>>, %arg4: memref<16x128x128xbf16, #tpu.memory_space<vmem>>, %arg5: memref<72x16xbf16, #tpu.memory_space<vmem>>, %arg6: memref<9x128x128xbf16, #tpu.memory_space<vmem>>, %arg7: memref<3x128xf32, #tpu.memory_space<vmem>>, %arg8: memref<1x8x128xf32, #tpu.memory_space<vmem>>) attributes {dimension_semantics = [#tpu.dimension_semantics<parallel>], iteration_bounds = array<i64: 2>, scalar_prefetch = 0 : i64, scratch_operands = 0 : i64, tpu.core_type = #tpu.core_type<tc>, window_params = [{transform_indices = @transform_0, window_bounds = array<i64: 1, 128, 256>}, {pipeline_mode = #tpu.pipeline_mode<synchronous>, transform_indices = @transform_1, window_bounds = array<i64: 256, 128>}, {pipeline_mode = #tpu.pipeline_mode<synchronous>, transform_indices = @transform_2, window_bounds = array<i64: 256, 128>}, {pipeline_mode = #tpu.pipeline_mode<synchronous>, transform_indices = @transform_3, window_bounds = array<i64: 16, 128, 128>}, {pipeline_mode = #tpu.pipeline_mode<synchronous>, transform_indices = @transform_4, window_bounds = array<i64: 72, 16>}, {pipeline_mode = #tpu.pipeline_mode<synchronous>, transform_indices = @transform_5, window_bounds = array<i64: 9, 128, 128>}, {pipeline_mode = #tpu.pipeline_mode<synchronous>, transform_indices = @transform_6, window_bounds = array<i64: 3, 128>}, {transform_indices = @transform_7, window_bounds = array<i64: 1, 8, 128>}]} {
    %c0 = arith.constant 0 : index
    %c0_0 = arith.constant 0 : index
    %c0_1 = arith.constant 0 : index
    %0 = vector.load %arg1[%c0, %c0_0, %c0_1] : memref<1x128x256xbf16, #tpu.memory_space<vmem>>, vector<1x128x256xbf16>
    %1 = vector.shape_cast %0 : vector<1x128x256xbf16> to vector<128x256xbf16>
    %c0_2 = arith.constant 0 : index
    %c0_3 = arith.constant 0 : index
    %2 = vector.load %arg2[%c0_2, %c0_3] : memref<256x128xbf16, #tpu.memory_space<vmem>>, vector<256x128xbf16>
    %cst = arith.constant dense<0.000000e+00> : vector<128x128xf32>
    %3 = tpu.matmul %1, %2, %cst {dimension_numbers = #tpu.dot_dimension_numbers<[1], [0], [0], [1], [0, 0, 1, 1], [], []>} : vector<128x256xbf16>, vector<256x128xbf16>, vector<128x128xf32> -> vector<128x128xf32>
    %c0_4 = arith.constant 0 : index
    %c0_5 = arith.constant 0 : index
    %4 = vector.load %arg7[%c0_4, %c0_5] : memref<3x128xf32, #tpu.memory_space<vmem>>, vector<1x128xf32>
    %5 = vector.broadcast %4 : vector<1x128xf32> to vector<128x128xf32>
    %6 = arith.addf %3, %5 : vector<128x128xf32>
    %cst_6 = arith.constant 0.000000e+00 : f32
    %7 = vector.broadcast %cst_6 : f32 to vector<128x128xf32>
    %8 = arith.cmpf ogt, %6, %7 : vector<128x128xf32>
    %cst_7 = arith.constant 0.000000e+00 : f32
    %9 = vector.broadcast %cst_7 : f32 to vector<128x128xf32>
    %10 = arith.minimumf %6, %9 : vector<128x128xf32>
    %11 = math.exp %10 : vector<128x128xf32>
    %cst_8 = arith.constant 1.000000e+00 : f32
    %12 = vector.broadcast %cst_8 : f32 to vector<128x128xf32>
    %13 = arith.subf %11, %12 : vector<128x128xf32>
    %14 = arith.select %8, %6, %13 : vector<128x128xi1>, vector<128x128xf32>
    %c0_9 = arith.constant 0 : index
    %c0_10 = arith.constant 0 : index
    %15 = vector.load %arg3[%c0_9, %c0_10] : memref<256x128xbf16, #tpu.memory_space<vmem>>, vector<256x128xbf16>
    %16 = arith.truncf %14 : vector<128x128xf32> to vector<128x128xbf16>
    %cst_11 = arith.constant dense<0.000000e+00> : vector<256x128xf32>
    %17 = tpu.matmul %15, %16, %cst_11 {dimension_numbers = #tpu.dot_dimension_numbers<[1], [0], [0], [1], [0, 0, 1, 1], [], []>} : vector<256x128xbf16>, vector<128x128xbf16>, vector<256x128xf32> -> vector<256x128xf32>
    %18 = vector.extract_strided_slice %17 {offsets = [0, 0], sizes = [16, 128], strides = [1, 1]} : vector<256x128xf32> to vector<16x128xf32>
    %19 = arith.truncf %18 : vector<16x128xf32> to vector<16x128xbf16>
    %c0_12 = arith.constant 0 : index
    %c0_13 = arith.constant 0 : index
    %c0_14 = arith.constant 0 : index
    %20 = vector.load %arg4[%c0_12, %c0_13, %c0_14] : memref<16x128x128xbf16, #tpu.memory_space<vmem>>, vector<1x128x128xbf16>
    %21 = vector.shape_cast %20 : vector<1x128x128xbf16> to vector<128x128xbf16>
    %cst_15 = arith.constant dense<0.000000e+00> : vector<16x128xf32>
    %22 = tpu.matmul %19, %21, %cst_15 {dimension_numbers = #tpu.dot_dimension_numbers<[1], [0], [0], [1], [0, 0, 1, 1], [], []>} : vector<16x128xbf16>, vector<128x128xbf16>, vector<16x128xf32> -> vector<16x128xf32>
    %23 = vector.extract_strided_slice %17 {offsets = [16, 0], sizes = [16, 128], strides = [1, 1]} : vector<256x128xf32> to vector<16x128xf32>
    %24 = arith.truncf %23 : vector<16x128xf32> to vector<16x128xbf16>
    %c1 = arith.constant 1 : index
    %c0_16 = arith.constant 0 : index
    %c0_17 = arith.constant 0 : index
    %25 = vector.load %arg4[%c1, %c0_16, %c0_17] : memref<16x128x128xbf16, #tpu.memory_space<vmem>>, vector<1x128x128xbf16>
    %26 = vector.shape_cast %25 : vector<1x128x128xbf16> to vector<128x128xbf16>
    %cst_18 = arith.constant dense<0.000000e+00> : vector<16x128xf32>
    %27 = tpu.matmul %24, %26, %cst_18 {dimension_numbers = #tpu.dot_dimension_numbers<[1], [0], [0], [1], [0, 0, 1, 1], [], []>} : vector<16x128xbf16>, vector<128x128xbf16>, vector<16x128xf32> -> vector<16x128xf32>
    %28 = arith.addf %22, %27 : vector<16x128xf32>
    %29 = vector.extract_strided_slice %17 {offsets = [32, 0], sizes = [16, 128], strides = [1, 1]} : vector<256x128xf32> to vector<16x128xf32>
    %30 = arith.truncf %29 : vector<16x128xf32> to vector<16x128xbf16>
    %c2 = arith.constant 2 : index
    %c0_19 = arith.constant 0 : index
    %c0_20 = arith.constant 0 : index
    %31 = vector.load %arg4[%c2, %c0_19, %c0_20] : memref<16x128x128xbf16, #tpu.memory_space<vmem>>, vector<1x128x128xbf16>
    %32 = vector.shape_cast %31 : vector<1x128x128xbf16> to vector<128x128xbf16>
    %cst_21 = arith.constant dense<0.000000e+00> : vector<16x128xf32>
    %33 = tpu.matmul %30, %32, %cst_21 {dimension_numbers = #tpu.dot_dimension_numbers<[1], [0], [0], [1], [0, 0, 1, 1], [], []>} : vector<16x128xbf16>, vector<128x128xbf16>, vector<16x128xf32> -> vector<16x128xf32>
    %34 = arith.addf %28, %33 : vector<16x128xf32>
    %35 = vector.extract_strided_slice %17 {offsets = [48, 0], sizes = [16, 128], strides = [1, 1]} : vector<256x128xf32> to vector<16x128xf32>
    %36 = arith.truncf %35 : vector<16x128xf32> to vector<16x128xbf16>
    %c3 = arith.constant 3 : index
    %c0_22 = arith.constant 0 : index
    %c0_23 = arith.constant 0 : index
    %37 = vector.load %arg4[%c3, %c0_22, %c0_23] : memref<16x128x128xbf16, #tpu.memory_space<vmem>>, vector<1x128x128xbf16>
    %38 = vector.shape_cast %37 : vector<1x128x128xbf16> to vector<128x128xbf16>
    %cst_24 = arith.constant dense<0.000000e+00> : vector<16x128xf32>
    %39 = tpu.matmul %36, %38, %cst_24 {dimension_numbers = #tpu.dot_dimension_numbers<[1], [0], [0], [1], [0, 0, 1, 1], [], []>} : vector<16x128xbf16>, vector<128x128xbf16>, vector<16x128xf32> -> vector<16x128xf32>
    %40 = arith.addf %34, %39 : vector<16x128xf32>
    %41 = vector.extract_strided_slice %17 {offsets = [64, 0], sizes = [16, 128], strides = [1, 1]} : vector<256x128xf32> to vector<16x128xf32>
    %42 = arith.truncf %41 : vector<16x128xf32> to vector<16x128xbf16>
    %c4 = arith.constant 4 : index
    %c0_25 = arith.constant 0 : index
    %c0_26 = arith.constant 0 : index
    %43 = vector.load %arg4[%c4, %c0_25, %c0_26] : memref<16x128x128xbf16, #tpu.memory_space<vmem>>, vector<1x128x128xbf16>
    %44 = vector.shape_cast %43 : vector<1x128x128xbf16> to vector<128x128xbf16>
    %cst_27 = arith.constant dense<0.000000e+00> : vector<16x128xf32>
    %45 = tpu.matmul %42, %44, %cst_27 {dimension_numbers = #tpu.dot_dimension_numbers<[1], [0], [0], [1], [0, 0, 1, 1], [], []>} : vector<16x128xbf16>, vector<128x128xbf16>, vector<16x128xf32> -> vector<16x128xf32>
    %46 = arith.addf %40, %45 : vector<16x128xf32>
    %47 = vector.extract_strided_slice %17 {offsets = [80, 0], sizes = [16, 128], strides = [1, 1]} : vector<256x128xf32> to vector<16x128xf32>
    %48 = arith.truncf %47 : vector<16x128xf32> to vector<16x128xbf16>
    %c5 = arith.constant 5 : index
    %c0_28 = arith.constant 0 : index
    %c0_29 = arith.constant 0 : index
    %49 = vector.load %arg4[%c5, %c0_28, %c0_29] : memref<16x128x128xbf16, #tpu.memory_space<vmem>>, vector<1x128x128xbf16>
    %50 = vector.shape_cast %49 : vector<1x128x128xbf16> to vector<128x128xbf16>
    %cst_30 = arith.constant dense<0.000000e+00> : vector<16x128xf32>
    %51 = tpu.matmul %48, %50, %cst_30 {dimension_numbers = #tpu.dot_dimension_numbers<[1], [0], [0], [1], [0, 0, 1, 1], [], []>} : vector<16x128xbf16>, vector<128x128xbf16>, vector<16x128xf32> -> vector<16x128xf32>
    %52 = arith.addf %46, %51 : vector<16x128xf32>
    %53 = vector.extract_strided_slice %17 {offsets = [96, 0], sizes = [16, 128], strides = [1, 1]} : vector<256x128xf32> to vector<16x128xf32>
    %54 = arith.truncf %53 : vector<16x128xf32> to vector<16x128xbf16>
    %c6 = arith.constant 6 : index
    %c0_31 = arith.constant 0 : index
    %c0_32 = arith.constant 0 : index
    %55 = vector.load %arg4[%c6, %c0_31, %c0_32] : memref<16x128x128xbf16, #tpu.memory_space<vmem>>, vector<1x128x128xbf16>
    %56 = vector.shape_cast %55 : vector<1x128x128xbf16> to vector<128x128xbf16>
    %cst_33 = arith.constant dense<0.000000e+00> : vector<16x128xf32>
    %57 = tpu.matmul %54, %56, %cst_33 {dimension_numbers = #tpu.dot_dimension_numbers<[1], [0], [0], [1], [0, 0, 1, 1], [], []>} : vector<16x128xbf16>, vector<128x128xbf16>, vector<16x128xf32> -> vector<16x128xf32>
    %58 = arith.addf %52, %57 : vector<16x128xf32>
    %59 = vector.extract_strided_slice %17 {offsets = [112, 0], sizes = [16, 128], strides = [1, 1]} : vector<256x128xf32> to vector<16x128xf32>
    %60 = arith.truncf %59 : vector<16x128xf32> to vector<16x128xbf16>
    %c7 = arith.constant 7 : index
    %c0_34 = arith.constant 0 : index
    %c0_35 = arith.constant 0 : index
    %61 = vector.load %arg4[%c7, %c0_34, %c0_35] : memref<16x128x128xbf16, #tpu.memory_space<vmem>>, vector<1x128x128xbf16>
    %62 = vector.shape_cast %61 : vector<1x128x128xbf16> to vector<128x128xbf16>
    %cst_36 = arith.constant dense<0.000000e+00> : vector<16x128xf32>
    %63 = tpu.matmul %60, %62, %cst_36 {dimension_numbers = #tpu.dot_dimension_numbers<[1], [0], [0], [1], [0, 0, 1, 1], [], []>} : vector<16x128xbf16>, vector<128x128xbf16>, vector<16x128xf32> -> vector<16x128xf32>
    %64 = arith.addf %58, %63 : vector<16x128xf32>
    %65 = vector.extract_strided_slice %17 {offsets = [128, 0], sizes = [16, 128], strides = [1, 1]} : vector<256x128xf32> to vector<16x128xf32>
    %66 = arith.truncf %65 : vector<16x128xf32> to vector<16x128xbf16>
    %c8 = arith.constant 8 : index
    %c0_37 = arith.constant 0 : index
    %c0_38 = arith.constant 0 : index
    %67 = vector.load %arg4[%c8, %c0_37, %c0_38] : memref<16x128x128xbf16, #tpu.memory_space<vmem>>, vector<1x128x128xbf16>
    %68 = vector.shape_cast %67 : vector<1x128x128xbf16> to vector<128x128xbf16>
    %cst_39 = arith.constant dense<0.000000e+00> : vector<16x128xf32>
    %69 = tpu.matmul %66, %68, %cst_39 {dimension_numbers = #tpu.dot_dimension_numbers<[1], [0], [0], [1], [0, 0, 1, 1], [], []>} : vector<16x128xbf16>, vector<128x128xbf16>, vector<16x128xf32> -> vector<16x128xf32>
    %70 = arith.addf %64, %69 : vector<16x128xf32>
    %71 = vector.extract_strided_slice %17 {offsets = [144, 0], sizes = [16, 128], strides = [1, 1]} : vector<256x128xf32> to vector<16x128xf32>
    %72 = arith.truncf %71 : vector<16x128xf32> to vector<16x128xbf16>
    %c9 = arith.constant 9 : index
    %c0_40 = arith.constant 0 : index
    %c0_41 = arith.constant 0 : index
    %73 = vector.load %arg4[%c9, %c0_40, %c0_41] : memref<16x128x128xbf16, #tpu.memory_space<vmem>>, vector<1x128x128xbf16>
    %74 = vector.shape_cast %73 : vector<1x128x128xbf16> to vector<128x128xbf16>
    %cst_42 = arith.constant dense<0.000000e+00> : vector<16x128xf32>
    %75 = tpu.matmul %72, %74, %cst_42 {dimension_numbers = #tpu.dot_dimension_numbers<[1], [0], [0], [1], [0, 0, 1, 1], [], []>} : vector<16x128xbf16>, vector<128x128xbf16>, vector<16x128xf32> -> vector<16x128xf32>
    %76 = arith.addf %70, %75 : vector<16x128xf32>
    %77 = vector.extract_strided_slice %17 {offsets = [160, 0], sizes = [16, 128], strides = [1, 1]} : vector<256x128xf32> to vector<16x128xf32>
    %78 = arith.truncf %77 : vector<16x128xf32> to vector<16x128xbf16>
    %c10 = arith.constant 10 : index
    %c0_43 = arith.constant 0 : index
    %c0_44 = arith.constant 0 : index
    %79 = vector.load %arg4[%c10, %c0_43, %c0_44] : memref<16x128x128xbf16, #tpu.memory_space<vmem>>, vector<1x128x128xbf16>
    %80 = vector.shape_cast %79 : vector<1x128x128xbf16> to vector<128x128xbf16>
    %cst_45 = arith.constant dense<0.000000e+00> : vector<16x128xf32>
    %81 = tpu.matmul %78, %80, %cst_45 {dimension_numbers = #tpu.dot_dimension_numbers<[1], [0], [0], [1], [0, 0, 1, 1], [], []>} : vector<16x128xbf16>, vector<128x128xbf16>, vector<16x128xf32> -> vector<16x128xf32>
    %82 = arith.addf %76, %81 : vector<16x128xf32>
    %83 = vector.extract_strided_slice %17 {offsets = [176, 0], sizes = [16, 128], strides = [1, 1]} : vector<256x128xf32> to vector<16x128xf32>
    %84 = arith.truncf %83 : vector<16x128xf32> to vector<16x128xbf16>
    %c11 = arith.constant 11 : index
    %c0_46 = arith.constant 0 : index
    %c0_47 = arith.constant 0 : index
    %85 = vector.load %arg4[%c11, %c0_46, %c0_47] : memref<16x128x128xbf16, #tpu.memory_space<vmem>>, vector<1x128x128xbf16>
    %86 = vector.shape_cast %85 : vector<1x128x128xbf16> to vector<128x128xbf16>
    %cst_48 = arith.constant dense<0.000000e+00> : vector<16x128xf32>
    %87 = tpu.matmul %84, %86, %cst_48 {dimension_numbers = #tpu.dot_dimension_numbers<[1], [0], [0], [1], [0, 0, 1, 1], [], []>} : vector<16x128xbf16>, vector<128x128xbf16>, vector<16x128xf32> -> vector<16x128xf32>
    %88 = arith.addf %82, %87 : vector<16x128xf32>
    %89 = vector.extract_strided_slice %17 {offsets = [192, 0], sizes = [16, 128], strides = [1, 1]} : vector<256x128xf32> to vector<16x128xf32>
    %90 = arith.truncf %89 : vector<16x128xf32> to vector<16x128xbf16>
    %c12 = arith.constant 12 : index
    %c0_49 = arith.constant 0 : index
    %c0_50 = arith.constant 0 : index
    %91 = vector.load %arg4[%c12, %c0_49, %c0_50] : memref<16x128x128xbf16, #tpu.memory_space<vmem>>, vector<1x128x128xbf16>
    %92 = vector.shape_cast %91 : vector<1x128x128xbf16> to vector<128x128xbf16>
    %cst_51 = arith.constant dense<0.000000e+00> : vector<16x128xf32>
    %93 = tpu.matmul %90, %92, %cst_51 {dimension_numbers = #tpu.dot_dimension_numbers<[1], [0], [0], [1], [0, 0, 1, 1], [], []>} : vector<16x128xbf16>, vector<128x128xbf16>, vector<16x128xf32> -> vector<16x128xf32>
    %94 = arith.addf %88, %93 : vector<16x128xf32>
    %95 = vector.extract_strided_slice %17 {offsets = [208, 0], sizes = [16, 128], strides = [1, 1]} : vector<256x128xf32> to vector<16x128xf32>
    %96 = arith.truncf %95 : vector<16x128xf32> to vector<16x128xbf16>
    %c13 = arith.constant 13 : index
    %c0_52 = arith.constant 0 : index
    %c0_53 = arith.constant 0 : index
    %97 = vector.load %arg4[%c13, %c0_52, %c0_53] : memref<16x128x128xbf16, #tpu.memory_space<vmem>>, vector<1x128x128xbf16>
    %98 = vector.shape_cast %97 : vector<1x128x128xbf16> to vector<128x128xbf16>
    %cst_54 = arith.constant dense<0.000000e+00> : vector<16x128xf32>
    %99 = tpu.matmul %96, %98, %cst_54 {dimension_numbers = #tpu.dot_dimension_numbers<[1], [0], [0], [1], [0, 0, 1, 1], [], []>} : vector<16x128xbf16>, vector<128x128xbf16>, vector<16x128xf32> -> vector<16x128xf32>
    %100 = arith.addf %94, %99 : vector<16x128xf32>
    %101 = vector.extract_strided_slice %17 {offsets = [224, 0], sizes = [16, 128], strides = [1, 1]} : vector<256x128xf32> to vector<16x128xf32>
    %102 = arith.truncf %101 : vector<16x128xf32> to vector<16x128xbf16>
    %c14 = arith.constant 14 : index
    %c0_55 = arith.constant 0 : index
    %c0_56 = arith.constant 0 : index
    %103 = vector.load %arg4[%c14, %c0_55, %c0_56] : memref<16x128x128xbf16, #tpu.memory_space<vmem>>, vector<1x128x128xbf16>
    %104 = vector.shape_cast %103 : vector<1x128x128xbf16> to vector<128x128xbf16>
    %cst_57 = arith.constant dense<0.000000e+00> : vector<16x128xf32>
    %105 = tpu.matmul %102, %104, %cst_57 {dimension_numbers = #tpu.dot_dimension_numbers<[1], [0], [0], [1], [0, 0, 1, 1], [], []>} : vector<16x128xbf16>, vector<128x128xbf16>, vector<16x128xf32> -> vector<16x128xf32>
    %106 = arith.addf %100, %105 : vector<16x128xf32>
    %107 = vector.extract_strided_slice %17 {offsets = [240, 0], sizes = [16, 128], strides = [1, 1]} : vector<256x128xf32> to vector<16x128xf32>
    %108 = arith.truncf %107 : vector<16x128xf32> to vector<16x128xbf16>
    %c15 = arith.constant 15 : index
    %c0_58 = arith.constant 0 : index
    %c0_59 = arith.constant 0 : index
    %109 = vector.load %arg4[%c15, %c0_58, %c0_59] : memref<16x128x128xbf16, #tpu.memory_space<vmem>>, vector<1x128x128xbf16>
    %110 = vector.shape_cast %109 : vector<1x128x128xbf16> to vector<128x128xbf16>
    %cst_60 = arith.constant dense<0.000000e+00> : vector<16x128xf32>
    %111 = tpu.matmul %108, %110, %cst_60 {dimension_numbers = #tpu.dot_dimension_numbers<[1], [0], [0], [1], [0, 0, 1, 1], [], []>} : vector<16x128xbf16>, vector<128x128xbf16>, vector<16x128xf32> -> vector<16x128xf32>
    %112 = arith.addf %106, %111 : vector<16x128xf32>
    %c1_61 = arith.constant 1 : index
    %c0_62 = arith.constant 0 : index
    %113 = vector.load %arg7[%c1_61, %c0_62] : memref<3x128xf32, #tpu.memory_space<vmem>>, vector<1x128xf32>
    %114 = vector.broadcast %113 : vector<1x128xf32> to vector<16x128xf32>
    %115 = arith.addf %112, %114 : vector<16x128xf32>
    %cst_63 = arith.constant 0.000000e+00 : f32
    %116 = vector.broadcast %cst_63 : f32 to vector<16x128xf32>
    %117 = arith.cmpf ogt, %115, %116 : vector<16x128xf32>
    %cst_64 = arith.constant 0.000000e+00 : f32
    %118 = vector.broadcast %cst_64 : f32 to vector<16x128xf32>
    %119 = arith.minimumf %115, %118 : vector<16x128xf32>
    %120 = math.exp %119 : vector<16x128xf32>
    %cst_65 = arith.constant 1.000000e+00 : f32
    %121 = vector.broadcast %cst_65 : f32 to vector<16x128xf32>
    %122 = arith.subf %120, %121 : vector<16x128xf32>
    %123 = arith.select %117, %115, %122 : vector<16x128xi1>, vector<16x128xf32>
    %c0_66 = arith.constant 0 : index
    %c0_67 = arith.constant 0 : index
    %124 = vector.load %arg5[%c0_66, %c0_67] : memref<72x16xbf16, #tpu.memory_space<vmem>>, vector<72x16xbf16>
    %125 = arith.truncf %123 : vector<16x128xf32> to vector<16x128xbf16>
    %cst_68 = arith.constant dense<0.000000e+00> : vector<72x128xf32>
    %126 = tpu.matmul %124, %125, %cst_68 {dimension_numbers = #tpu.dot_dimension_numbers<[1], [0], [0], [1], [0, 0, 1, 1], [], []>} : vector<72x16xbf16>, vector<16x128xbf16>, vector<72x128xf32> -> vector<72x128xf32>
    %127 = vector.extract_strided_slice %126 {offsets = [0, 0], sizes = [8, 128], strides = [1, 1]} : vector<72x128xf32> to vector<8x128xf32>
    %128 = arith.truncf %127 : vector<8x128xf32> to vector<8x128xbf16>
    %c0_69 = arith.constant 0 : index
    %c0_70 = arith.constant 0 : index
    %c0_71 = arith.constant 0 : index
    %129 = vector.load %arg6[%c0_69, %c0_70, %c0_71] : memref<9x128x128xbf16, #tpu.memory_space<vmem>>, vector<1x128x128xbf16>
    %130 = vector.shape_cast %129 : vector<1x128x128xbf16> to vector<128x128xbf16>
    %cst_72 = arith.constant dense<0.000000e+00> : vector<8x128xf32>
    %131 = tpu.matmul %128, %130, %cst_72 {dimension_numbers = #tpu.dot_dimension_numbers<[1], [0], [0], [1], [0, 0, 1, 1], [], []>} : vector<8x128xbf16>, vector<128x128xbf16>, vector<8x128xf32> -> vector<8x128xf32>
    %132 = vector.extract_strided_slice %126 {offsets = [8, 0], sizes = [8, 128], strides = [1, 1]} : vector<72x128xf32> to vector<8x128xf32>
    %133 = arith.truncf %132 : vector<8x128xf32> to vector<8x128xbf16>
    %c1_73 = arith.constant 1 : index
    %c0_74 = arith.constant 0 : index
    %c0_75 = arith.constant 0 : index
    %134 = vector.load %arg6[%c1_73, %c0_74, %c0_75] : memref<9x128x128xbf16, #tpu.memory_space<vmem>>, vector<1x128x128xbf16>
    %135 = vector.shape_cast %134 : vector<1x128x128xbf16> to vector<128x128xbf16>
    %cst_76 = arith.constant dense<0.000000e+00> : vector<8x128xf32>
    %136 = tpu.matmul %133, %135, %cst_76 {dimension_numbers = #tpu.dot_dimension_numbers<[1], [0], [0], [1], [0, 0, 1, 1], [], []>} : vector<8x128xbf16>, vector<128x128xbf16>, vector<8x128xf32> -> vector<8x128xf32>
    %137 = arith.addf %131, %136 : vector<8x128xf32>
    %138 = vector.extract_strided_slice %126 {offsets = [16, 0], sizes = [8, 128], strides = [1, 1]} : vector<72x128xf32> to vector<8x128xf32>
    %139 = arith.truncf %138 : vector<8x128xf32> to vector<8x128xbf16>
    %c2_77 = arith.constant 2 : index
    %c0_78 = arith.constant 0 : index
    %c0_79 = arith.constant 0 : index
    %140 = vector.load %arg6[%c2_77, %c0_78, %c0_79] : memref<9x128x128xbf16, #tpu.memory_space<vmem>>, vector<1x128x128xbf16>
    %141 = vector.shape_cast %140 : vector<1x128x128xbf16> to vector<128x128xbf16>
    %cst_80 = arith.constant dense<0.000000e+00> : vector<8x128xf32>
    %142 = tpu.matmul %139, %141, %cst_80 {dimension_numbers = #tpu.dot_dimension_numbers<[1], [0], [0], [1], [0, 0, 1, 1], [], []>} : vector<8x128xbf16>, vector<128x128xbf16>, vector<8x128xf32> -> vector<8x128xf32>
    %143 = arith.addf %137, %142 : vector<8x128xf32>
    %144 = vector.extract_strided_slice %126 {offsets = [24, 0], sizes = [8, 128], strides = [1, 1]} : vector<72x128xf32> to vector<8x128xf32>
    %145 = arith.truncf %144 : vector<8x128xf32> to vector<8x128xbf16>
    %c3_81 = arith.constant 3 : index
    %c0_82 = arith.constant 0 : index
    %c0_83 = arith.constant 0 : index
    %146 = vector.load %arg6[%c3_81, %c0_82, %c0_83] : memref<9x128x128xbf16, #tpu.memory_space<vmem>>, vector<1x128x128xbf16>
    %147 = vector.shape_cast %146 : vector<1x128x128xbf16> to vector<128x128xbf16>
    %cst_84 = arith.constant dense<0.000000e+00> : vector<8x128xf32>
    %148 = tpu.matmul %145, %147, %cst_84 {dimension_numbers = #tpu.dot_dimension_numbers<[1], [0], [0], [1], [0, 0, 1, 1], [], []>} : vector<8x128xbf16>, vector<128x128xbf16>, vector<8x128xf32> -> vector<8x128xf32>
    %149 = arith.addf %143, %148 : vector<8x128xf32>
    %150 = vector.extract_strided_slice %126 {offsets = [32, 0], sizes = [8, 128], strides = [1, 1]} : vector<72x128xf32> to vector<8x128xf32>
    %151 = arith.truncf %150 : vector<8x128xf32> to vector<8x128xbf16>
    %c4_85 = arith.constant 4 : index
    %c0_86 = arith.constant 0 : index
    %c0_87 = arith.constant 0 : index
    %152 = vector.load %arg6[%c4_85, %c0_86, %c0_87] : memref<9x128x128xbf16, #tpu.memory_space<vmem>>, vector<1x128x128xbf16>
    %153 = vector.shape_cast %152 : vector<1x128x128xbf16> to vector<128x128xbf16>
    %cst_88 = arith.constant dense<0.000000e+00> : vector<8x128xf32>
    %154 = tpu.matmul %151, %153, %cst_88 {dimension_numbers = #tpu.dot_dimension_numbers<[1], [0], [0], [1], [0, 0, 1, 1], [], []>} : vector<8x128xbf16>, vector<128x128xbf16>, vector<8x128xf32> -> vector<8x128xf32>
    %155 = arith.addf %149, %154 : vector<8x128xf32>
    %156 = vector.extract_strided_slice %126 {offsets = [40, 0], sizes = [8, 128], strides = [1, 1]} : vector<72x128xf32> to vector<8x128xf32>
    %157 = arith.truncf %156 : vector<8x128xf32> to vector<8x128xbf16>
    %c5_89 = arith.constant 5 : index
    %c0_90 = arith.constant 0 : index
    %c0_91 = arith.constant 0 : index
    %158 = vector.load %arg6[%c5_89, %c0_90, %c0_91] : memref<9x128x128xbf16, #tpu.memory_space<vmem>>, vector<1x128x128xbf16>
    %159 = vector.shape_cast %158 : vector<1x128x128xbf16> to vector<128x128xbf16>
    %cst_92 = arith.constant dense<0.000000e+00> : vector<8x128xf32>
    %160 = tpu.matmul %157, %159, %cst_92 {dimension_numbers = #tpu.dot_dimension_numbers<[1], [0], [0], [1], [0, 0, 1, 1], [], []>} : vector<8x128xbf16>, vector<128x128xbf16>, vector<8x128xf32> -> vector<8x128xf32>
    %161 = arith.addf %155, %160 : vector<8x128xf32>
    %162 = vector.extract_strided_slice %126 {offsets = [48, 0], sizes = [8, 128], strides = [1, 1]} : vector<72x128xf32> to vector<8x128xf32>
    %163 = arith.truncf %162 : vector<8x128xf32> to vector<8x128xbf16>
    %c6_93 = arith.constant 6 : index
    %c0_94 = arith.constant 0 : index
    %c0_95 = arith.constant 0 : index
    %164 = vector.load %arg6[%c6_93, %c0_94, %c0_95] : memref<9x128x128xbf16, #tpu.memory_space<vmem>>, vector<1x128x128xbf16>
    %165 = vector.shape_cast %164 : vector<1x128x128xbf16> to vector<128x128xbf16>
    %cst_96 = arith.constant dense<0.000000e+00> : vector<8x128xf32>
    %166 = tpu.matmul %163, %165, %cst_96 {dimension_numbers = #tpu.dot_dimension_numbers<[1], [0], [0], [1], [0, 0, 1, 1], [], []>} : vector<8x128xbf16>, vector<128x128xbf16>, vector<8x128xf32> -> vector<8x128xf32>
    %167 = arith.addf %161, %166 : vector<8x128xf32>
    %168 = vector.extract_strided_slice %126 {offsets = [56, 0], sizes = [8, 128], strides = [1, 1]} : vector<72x128xf32> to vector<8x128xf32>
    %169 = arith.truncf %168 : vector<8x128xf32> to vector<8x128xbf16>
    %c7_97 = arith.constant 7 : index
    %c0_98 = arith.constant 0 : index
    %c0_99 = arith.constant 0 : index
    %170 = vector.load %arg6[%c7_97, %c0_98, %c0_99] : memref<9x128x128xbf16, #tpu.memory_space<vmem>>, vector<1x128x128xbf16>
    %171 = vector.shape_cast %170 : vector<1x128x128xbf16> to vector<128x128xbf16>
    %cst_100 = arith.constant dense<0.000000e+00> : vector<8x128xf32>
    %172 = tpu.matmul %169, %171, %cst_100 {dimension_numbers = #tpu.dot_dimension_numbers<[1], [0], [0], [1], [0, 0, 1, 1], [], []>} : vector<8x128xbf16>, vector<128x128xbf16>, vector<8x128xf32> -> vector<8x128xf32>
    %173 = arith.addf %167, %172 : vector<8x128xf32>
    %174 = vector.extract_strided_slice %126 {offsets = [64, 0], sizes = [8, 128], strides = [1, 1]} : vector<72x128xf32> to vector<8x128xf32>
    %175 = arith.truncf %174 : vector<8x128xf32> to vector<8x128xbf16>
    %c8_101 = arith.constant 8 : index
    %c0_102 = arith.constant 0 : index
    %c0_103 = arith.constant 0 : index
    %176 = vector.load %arg6[%c8_101, %c0_102, %c0_103] : memref<9x128x128xbf16, #tpu.memory_space<vmem>>, vector<1x128x128xbf16>
    %177 = vector.shape_cast %176 : vector<1x128x128xbf16> to vector<128x128xbf16>
    %cst_104 = arith.constant dense<0.000000e+00> : vector<8x128xf32>
    %178 = tpu.matmul %175, %177, %cst_104 {dimension_numbers = #tpu.dot_dimension_numbers<[1], [0], [0], [1], [0, 0, 1, 1], [], []>} : vector<8x128xbf16>, vector<128x128xbf16>, vector<8x128xf32> -> vector<8x128xf32>
    %179 = arith.addf %173, %178 : vector<8x128xf32>
    %c2_105 = arith.constant 2 : index
    %c0_106 = arith.constant 0 : index
    %180 = vector.load %arg7[%c2_105, %c0_106] : memref<3x128xf32, #tpu.memory_space<vmem>>, vector<1x128xf32>
    %181 = vector.broadcast %180 : vector<1x128xf32> to vector<8x128xf32>
    %182 = arith.addf %179, %181 : vector<8x128xf32>
    %cst_107 = arith.constant 0.000000e+00 : f32
    %183 = vector.broadcast %cst_107 : f32 to vector<8x128xf32>
    %184 = arith.cmpf ogt, %182, %183 : vector<8x128xf32>
    %cst_108 = arith.constant 0.000000e+00 : f32
    %185 = vector.broadcast %cst_108 : f32 to vector<8x128xf32>
    %186 = arith.minimumf %182, %185 : vector<8x128xf32>
    %187 = math.exp %186 : vector<8x128xf32>
    %cst_109 = arith.constant 1.000000e+00 : f32
    %188 = vector.broadcast %cst_109 : f32 to vector<8x128xf32>
    %189 = arith.subf %187, %188 : vector<8x128xf32>
    %190 = arith.select %184, %182, %189 : vector<8x128xi1>, vector<8x128xf32>
    %c0_110 = arith.constant 0 : index
    %c0_111 = arith.constant 0 : index
    %c0_112 = arith.constant 0 : index
    %191 = vector.load %arg8[%c0_110, %c0_111, %c0_112] : memref<1x8x128xf32, #tpu.memory_space<vmem>>, vector<1x8x128xf32>
    %192 = vector.shape_cast %191 : vector<1x8x128xf32> to vector<8x128xf32>
    %193 = vector.shape_cast %190 : vector<8x128xf32> to vector<1x8x128xf32>
    tpu.vector_store %arg8[%c0_110, %c0_111, %c0_112], %193 {strides = array<i32>} : memref<1x8x128xf32, #tpu.memory_space<vmem>>, vector<1x8x128xf32>,
    return
  }
  func.func @transform_0(%arg0: i32) -> (i32, i32, i32) {
    %c0_i32 = arith.constant 0 : i32
    %c0_i32_0 = arith.constant 0 : i32
    %c0_i32_1 = arith.constant 0 : i32
    return %arg0, %c0_i32, %c0_i32_0 : i32, i32, i32
  }
  func.func @transform_1(%arg0: i32) -> (i32, i32) {
    %c0_i32 = arith.constant 0 : i32
    %c0_i32_0 = arith.constant 0 : i32
    %c0_i32_1 = arith.constant 0 : i32
    return %c0_i32, %c0_i32_0 : i32, i32
  }
  func.func @transform_2(%arg0: i32) -> (i32, i32) {
    %c0_i32 = arith.constant 0 : i32
    %c0_i32_0 = arith.constant 0 : i32
    %c0_i32_1 = arith.constant 0 : i32
    return %c0_i32, %c0_i32_0 : i32, i32
  }
  func.func @transform_3(%arg0: i32) -> (i32, i32, i32) {
    %c0_i32 = arith.constant 0 : i32
    %c0_i32_0 = arith.constant 0 : i32
    %c0_i32_1 = arith.constant 0 : i32
    %c0_i32_2 = arith.constant 0 : i32
    return %c0_i32, %c0_i32_0, %c0_i32_1 : i32, i32, i32
  }
  func.func @transform_4(%arg0: i32) -> (i32, i32) {
    %c0_i32 = arith.constant 0 : i32
    %c0_i32_0 = arith.constant 0 : i32
    %c0_i32_1 = arith.constant 0 : i32
    return %c0_i32, %c0_i32_0 : i32, i32
  }
  func.func @transform_5(%arg0: i32) -> (i32, i32, i32) {
    %c0_i32 = arith.constant 0 : i32
    %c0_i32_0 = arith.constant 0 : i32
    %c0_i32_1 = arith.constant 0 : i32
    %c0_i32_2 = arith.constant 0 : i32
    return %c0_i32, %c0_i32_0, %c0_i32_1 : i32, i32, i32
  }
  func.func @transform_6(%arg0: i32) -> (i32, i32) {
    %c0_i32 = arith.constant 0 : i32
    %c0_i32_0 = arith.constant 0 : i32
    %c0_i32_1 = arith.constant 0 : i32
    return %c0_i32, %c0_i32_0 : i32, i32
  }
  func.func @transform_7(%arg0: i32) -> (i32, i32, i32) {
    %c0_i32 = arith.constant 0 : i32
    %c0_i32_0 = arith.constant 0 : i32
    %c0_i32_1 = arith.constant 0 : i32
    return %arg0, %c0_i32, %c0_i32_0 : i32, i32, i32
  }
}

</mosaic_0001>

<llo_original>
// kernel: forward.1
$region0: #{forward.1}
  #allocation0 [shape = 'u32[]', space=smem, size = 0x4, offset = 0x4, fixed_abs, tag = 'smem constant byte address 0x4 - core index']
  #allocation1 [shape = 'u32[72,128]{1,0:T(1,128)}', space=vmem, size = 0x9000, scoped, tag = 'internal scratch']
  %s0 = inlined_call_operand.vmem [shape: bf16[2,128,256], index: 0, kind: input, shape index: {}]
  %s1 = inlined_call_operand.vmem [shape: bf16[256,128], index: 1, kind: input, shape index: {}]
  %s2 = inlined_call_operand.vmem [shape: bf16[256,128], index: 2, kind: input, shape index: {}]
  %s3 = inlined_call_operand.vmem [shape: bf16[16,128,128], index: 3, kind: input, shape index: {}]
  %s4 = inlined_call_operand.vmem [shape: bf16[72,16], index: 4, kind: input, shape index: {}]
  %s5 = inlined_call_operand.vmem [shape: bf16[9,128,128], index: 5, kind: input, shape index: {}]
  %s6 = inlined_call_operand.vmem [shape: f32[3,128], index: 6, kind: input, shape index: {}]
  %s7 = inlined_call_operand.vmem [shape: f32[2,8,128], index: 7, kind: output, shape index: {}]
  %s8 = sld [smem:[#allocation0]]
  $region61: #{forward.1} parent=0
    _
  %s10 = ssub.s32 1, %s8
  %s11 = scalar_select 0, %s10, %s8
  loop: start=0, step=1, limit=4
  $region2: #{forward.1} parent=0 // loop_pre_header
    _
  $region3: #{forward.1} parent=0 // loop_header
    %s13 = sphi 0, %s17
    %p14 = scmp.ge.s32.totalorder %s13, 4
    %s23 = sphi 0, %s25
    %s26 = sphi 0, %s23
    %s27 = sphi 0, %s26
    %s43 = sphi 0, %s27
    %s47 = sphi 0, %s47
    %s49 = sphi 0, %s47
    %s50 = sphi 0, %s49
    %s64 = sphi 0, %s50
    %s68 = sphi 0, %s68
    %s70 = sphi 0, %s68
    %s71 = sphi 0, %s70
    %s85 = sphi 0, %s71
    %s89 = sphi 0, %s89
    %s91 = sphi 0, %s89
    %s92 = sphi 0, %s91
    %s106 = sphi 0, %s92
    %s110 = sphi 0, %s110
    %s112 = sphi 0, %s110
    %s113 = sphi 0, %s112
    %s127 = sphi 0, %s113
    %s131 = sphi 0, %s131
    %s133 = sphi 0, %s131
    %s134 = sphi 0, %s133
    %s148 = sphi 0, %s134
    %s152 = sphi 0, %s152
    %s154 = sphi 0, %s152
    %s155 = sphi 0, %s154
    %s169 = sphi 0, %s155
    %s175 = sphi 0, %s177
    %s178 = sphi 0, %s175
    %s179 = sphi 0, %s178
    %s195 = sphi 0, %s179
  $region4: #{forward.1} parent=0 // loop_header_branch
    %16 = sbr.rel (%p14) target = $region8
  $region5: #{forward.1} parent=0 // loop_body
    %s18 = ssub.s32 %s13, 1
    %s19 = ssub.s32 %s13, 2
    %s20 = sadd.s32 %s13, 1
    %s21 = ssub.s32 %s13, %s20
    %p22 = scmp.eq.s32.totalorder %s21, 0
    %s24 = sadd.s32 %s23, 1
    %s25 = scalar_select %p22, %s23, %s24
    %p28 = pneg %p22
    %p29 = scmp.eq.s32.totalorder %s13, 1
    %p30 = por %p28, %p29
    %p31 = scmp.ne.s32.totalorder %s23, %s26
    %p32 = scmp.eq.s32.totalorder %s13, 0
    %p33 = por %p31, %p32
    %p34 = scmp.ne.s32.totalorder %s23, %s26
    %p35 = scmp.eq.s32.totalorder %s18, 1
    %p36 = por %p34, %p35
    %p37 = scmp.ne.s32.totalorder %s26, %s27
    %p38 = scmp.eq.s32.totalorder %s18, 0
    %p39 = por %p37, %p38
    %p40 = scmp.ne.s32.totalorder %s26, %s27
    %p41 = scmp.eq.s32.totalorder %s19, 1
    %p42 = por %p40, %p41
    %p44 = scmp.ne.s32.totalorder %s27, %s43
    %p45 = scmp.eq.s32.totalorder %s19, 0
    %p46 = por %p44, %p45
    %s48 = sadd.s32 %s47, 1
    %p51 = scmp.eq.s32.totalorder %s13, 1
    %p52 = scmp.ne.s32.totalorder %s47, %s49
    %p53 = scmp.eq.s32.totalorder %s13, 0
    %p54 = por %p52, %p53
    %p55 = scmp.ne.s32.totalorder %s47, %s49
    %p56 = scmp.eq.s32.totalorder %s18, 1
    %p57 = por %p55, %p56
    %p58 = scmp.ne.s32.totalorder %s49, %s50
    %p59 = scmp.eq.s32.totalorder %s18, 0
    %p60 = por %p58, %p59
    %p61 = scmp.ne.s32.totalorder %s49, %s50
    %p62 = scmp.eq.s32.totalorder %s19, 1
    %p63 = por %p61, %p62
    %p65 = scmp.ne.s32.totalorder %s50, %s64
    %p66 = scmp.eq.s32.totalorder %s19, 0
    %p67 = por %p65, %p66
    %s69 = sadd.s32 %s68, 1
    %p72 = scmp.eq.s32.totalorder %s13, 1
    %p73 = scmp.ne.s32.totalorder %s68, %s70
    %p74 = scmp.eq.s32.totalorder %s13, 0
    %p75 = por %p73, %p74
    %p76 = scmp.ne.s32.totalorder %s68, %s70
    %p77 = scmp.eq.s32.totalorder %s18, 1
    %p78 = por %p76, %p77
    %p79 = scmp.ne.s32.totalorder %s70, %s71
    %p80 = scmp.eq.s32.totalorder %s18, 0
    %p81 = por %p79, %p80
    %p82 = scmp.ne.s32.totalorder %s70, %s71
    %p83 = scmp.eq.s32.totalorder %s19, 1
    %p84 = por %p82, %p83
    %p86 = scmp.ne.s32.totalorder %s71, %s85
    %p87 = scmp.eq.s32.totalorder %s19, 0
    %p88 = por %p86, %p87
    %s90 = sadd.s32 %s89, 1
    %p93 = scmp.eq.s32.totalorder %s13, 1
    %p94 = scmp.ne.s32.totalorder %s89, %s91
    %p95 = scmp.eq.s32.totalorder %s13, 0
    %p96 = por %p94, %p95
    %p97 = scmp.ne.s32.totalorder %s89, %s91
    %p98 = scmp.eq.s32.totalorder %s18, 1
    %p99 = por %p97, %p98
    %p100 = scmp.ne.s32.totalorder %s91, %s92
    %p101 = scmp.eq.s32.totalorder %s18, 0
    %p102 = por %p100, %p101
    %p103 = scmp.ne.s32.totalorder %s91, %s92
    %p104 = scmp.eq.s32.totalorder %s19, 1
    %p105 = por %p103, %p104
    %p107 = scmp.ne.s32.totalorder %s92, %s106
    %p108 = scmp.eq.s32.totalorder %s19, 0
    %p109 = por %p107, %p108
    %s111 = sadd.s32 %s110, 1
    %p114 = scmp.eq.s32.totalorder %s13, 1
    %p115 = scmp.ne.s32.totalorder %s110, %s112
    %p116 = scmp.eq.s32.totalorder %s13, 0
    %p117 = por %p115, %p116
    %p118 = scmp.ne.s32.totalorder %s110, %s112
    %p119 = scmp.eq.s32.totalorder %s18, 1
    %p120 = por %p118, %p119
    %p121 = scmp.ne.s32.totalorder %s112, %s113
    %p122 = scmp.eq.s32.totalorder %s18, 0
    %p123 = por %p121, %p122
    %p124 = scmp.ne.s32.totalorder %s112, %s113
    %p125 = scmp.eq.s32.totalorder %s19, 1
    %p126 = por %p124, %p125
    %p128 = scmp.ne.s32.totalorder %s113, %s127
    %p129 = scmp.eq.s32.totalorder %s19, 0
    %p130 = por %p128, %p129
    %s132 = sadd.s32 %s131, 1
    %p135 = scmp.eq.s32.totalorder %s13, 1
    %p136 = scmp.ne.s32.totalorder %s131, %s133
    %p137 = scmp.eq.s32.totalorder %s13, 0
    %p138 = por %p136, %p137
    %p139 = scmp.ne.s32.totalorder %s131, %s133
    %p140 = scmp.eq.s32.totalorder %s18, 1
    %p141 = por %p139, %p140
    %p142 = scmp.ne.s32.totalorder %s133, %s134
    %p143 = scmp.eq.s32.totalorder %s18, 0
    %p144 = por %p142, %p143
    %p145 = scmp.ne.s32.totalorder %s133, %s134
    %p146 = scmp.eq.s32.totalorder %s19, 1
    %p147 = por %p145, %p146
    %p149 = scmp.ne.s32.totalorder %s134, %s148
    %p150 = scmp.eq.s32.totalorder %s19, 0
    %p151 = por %p149, %p150
    %s153 = sadd.s32 %s152, 1
    %p156 = scmp.eq.s32.totalorder %s13, 1
    %p157 = scmp.ne.s32.totalorder %s152, %s154
    %p158 = scmp.eq.s32.totalorder %s13, 0
    %p159 = por %p157, %p158
    %p160 = scmp.ne.s32.totalorder %s152, %s154
    %p161 = scmp.eq.s32.totalorder %s18, 1
    %p162 = por %p160, %p161
    %p163 = scmp.ne.s32.totalorder %s154, %s155
    %p164 = scmp.eq.s32.totalorder %s18, 0
    %p165 = por %p163, %p164
    %p166 = scmp.ne.s32.totalorder %s154, %s155
    %p167 = scmp.eq.s32.totalorder %s19, 1
    %p168 = por %p166, %p167
    %p170 = scmp.ne.s32.totalorder %s155, %s169
    %p171 = scmp.eq.s32.totalorder %s19, 0
    %p172 = por %p170, %p171
    %s173 = ssub.s32 %s13, %s20
    %p174 = scmp.eq.s32.totalorder %s173, 0
    %s176 = sadd.s32 %s175, 1
    %s177 = scalar_select %p174, %s175, %s176
    %p180 = pneg %p174
    %p181 = scmp.eq.s32.totalorder %s13, 1
    %p182 = por %p180, %p181
    %p183 = scmp.ne.s32.totalorder %s175, %s178
    %p184 = scmp.eq.s32.totalorder %s13, 0
    %p185 = por %p183, %p184
    %p186 = scmp.ne.s32.totalorder %s175, %s178
    %p187 = scmp.eq.s32.totalorder %s18, 1
    %p188 = por %p186, %p187
    %p189 = scmp.ne.s32.totalorder %s178, %s179
    %p190 = scmp.eq.s32.totalorder %s18, 0
    %p191 = por %p189, %p190
    %p192 = scmp.ne.s32.totalorder %s178, %s179
    %p193 = scmp.eq.s32.totalorder %s19, 1
    %p194 = por %p192, %p193
    %p196 = scmp.ne.s32.totalorder %s179, %s195
    %p197 = scmp.eq.s32.totalorder %s19, 0
    %p198 = por %p196, %p197
    %p199 = scmp.le.s32.totalorder 1, %s13
    %p200 = scmp.lt.s32.totalorder %s13, 3
    %p201 = pnand %p199, %p200
    %p202 = pneg %p201
    // Predicated region
    $region9: #{forward.1} parent=5 // pred_check
      _
    $region10: #{forward.1} parent=5 // pred_check_branch
      %204 = sbr.rel (%p201) target = $region12
    $region11: #{forward.1} parent=5 // pred_region
      %s205 = ssub.s32 %s13, 1
      // Predicated region
      $region13: #{forward.1} parent=11 // pred_check
        %p206 = pneg %p60
      $region14: #{forward.1} parent=11 // pred_check_branch
        %208 = sbr.rel (%p206) target = $region16
      $region15: #{forward.1} parent=11 // pred_region
        _
      $region16: #{forward.1} parent=11 // pred_fallthru
        _
      // Predicated region
      $region17: #{forward.1} parent=11 // pred_check
        %p209 = pneg %p81
      $region18: #{forward.1} parent=11 // pred_check_branch
        %211 = sbr.rel (%p209) target = $region20
      $region19: #{forward.1} parent=11 // pred_region
        _
      $region20: #{forward.1} parent=11 // pred_fallthru
        _
      // Predicated region
      $region21: #{forward.1} parent=11 // pred_check
        %p212 = pneg %p102
      $region22: #{forward.1} parent=11 // pred_check_branch
        %214 = sbr.rel (%p212) target = $region24
      $region23: #{forward.1} parent=11 // pred_region
        _
      $region24: #{forward.1} parent=11 // pred_fallthru
        _
      // Predicated region
      $region25: #{forward.1} parent=11 // pred_check
        %p215 = pneg %p123
      $region26: #{forward.1} parent=11 // pred_check_branch
        %217 = sbr.rel (%p215) target = $region28
      $region27: #{forward.1} parent=11 // pred_region
        _
      $region28: #{forward.1} parent=11 // pred_fallthru
        _
      // Predicated region
      $region29: #{forward.1} parent=11 // pred_check
        %p218 = pneg %p144
      $region30: #{forward.1} parent=11 // pred_check_branch
        %220 = sbr.rel (%p218) target = $region32
      $region31: #{forward.1} parent=11 // pred_region
        _
      $region32: #{forward.1} parent=11 // pred_fallthru
        _
      // Predicated region
      $region33: #{forward.1} parent=11 // pred_check
        %p221 = pneg %p165
      $region34: #{forward.1} parent=11 // pred_check_branch
        %223 = sbr.rel (%p221) target = $region36
      $region35: #{forward.1} parent=11 // pred_region
        _
      $region36: #{forward.1} parent=11 // pred_fallthru
        _
    $region12: #{forward.1} parent=5 // pred_fallthru
      _
    %p224 = scmp.lt.s32.totalorder %s13, 2
    // Predicated region
    $region37: #{forward.1} parent=5 // pred_check
      %p225 = pneg %p224
    $region38: #{forward.1} parent=5 // pred_check_branch
      %227 = sbr.rel (%p225) target = $region40
    $region39: #{forward.1} parent=5 // pred_region
      // Predicated region
      $region41: #{forward.1} parent=39 // pred_check
        %p228 = pneg %p33
      $region42: #{forward.1} parent=39 // pred_check_branch
        %230 = sbr.rel (%p228) target = $region44
      $region43: #{forward.1} parent=39 // pred_region
        %p231 = scmp.lt.s32.totalorder %s13, 1
        %s232 = scalar_select %p231, %s13, 1
        %s233 = smul.addr %s232, 32
        %s234 = smul.addr %s233, 4
        %s235 = scalar_lea.vmem %s0, %s234
      $region44: #{forward.1} parent=39 // pred_fallthru
        _
    $region40: #{forward.1} parent=5 // pred_fallthru
      _
    %p236 = scmp.le.s32.totalorder 1, %s13
    %p237 = scmp.lt.s32.totalorder %s13, 3
    %p238 = pnand %p236, %p237
    %p239 = pneg %p238
    // Predicated region
    $region45: #{forward.1} parent=5 // pred_check
      _
    $region46: #{forward.1} parent=5 // pred_check_branch
      %241 = sbr.rel (%p238) target = $region48
    $region47: #{forward.1} parent=5 // pred_region
      %s242 = ssub.s32 %s13, 1
      %p243 = scmp.lt.s32.totalorder %s18, 1
      %s244 = scalar_select %p243, %s18, 1
      %s245 = smul.addr %s244, 32
      %s246 = smul.addr %s245, 4
      %s247 = scalar_lea.vmem %s0, %s246
      %p248 = pneg %p39
      %p249 = pneg %p36
      %p250 = pneg %p60
      %p251 = pneg %p57
      %p252 = pneg %p81
      %p253 = pneg %p78
      %p254 = pneg %p102
      %p255 = pneg %p99
      %p256 = pneg %p123
      %p257 = pneg %p120
      %p258 = pneg %p144
      %p259 = pneg %p141
      %p260 = pneg %p165
      %p261 = pneg %p162
      %p262 = pneg %p191
      %p263 = pneg %p188
      %p264 = scmp.lt.s32.totalorder %s18, 1
      %s265 = scalar_select %p264, %s18, 1
      %s266 = smul.addr %s265, 8
      %s267 = scalar_lea.vmem %s7, %s266
      %p268 = scmp.lt.s32.totalorder %s18, 1
      %s269 = scalar_select %p268, %s18, 1
      %s270 = smul.addr %s269, 32
      %s271 = smul.addr %s270, 4
      %s272 = scalar_lea.vmem %s0, %s271
      %p273 = scmp.lt.s32.totalorder %s18, 1
      %s274 = scalar_select %p273, %s18, 1
      %s275 = smul.addr %s274, 8
      %s276 = scalar_lea.vmem %s7, %s275
      %v278 = vld [vmem:[%s272] sm:$0xff]
      %v279 = vld [vmem:[%s272 + $0x8] sm:$0xff]
      %v280 = vld [vmem:[%s272 + $0x10] sm:$0xff]
      %v281 = vld [vmem:[%s272 + $0x18] sm:$0xff]
      %v282 = vld [vmem:[%s272 + $0x20] sm:$0xff]
      %v283 = vld [vmem:[%s272 + $0x28] sm:$0xff]
      %v284 = vld [vmem:[%s272 + $0x30] sm:$0xff]
      %v285 = vld [vmem:[%s272 + $0x38] sm:$0xff]
      %v286 = vld [vmem:[%s272 + $0x40] sm:$0xff]
      %v287 = vld [vmem:[%s272 + $0x48] sm:$0xff]
      %v288 = vld [vmem:[%s272 + $0x50] sm:$0xff]
      %v289 = vld [vmem:[%s272 + $0x58] sm:$0xff]
      %v290 = vld [vmem:[%s272 + $0x60] sm:$0xff]
      %v291 = vld [vmem:[%s272 + $0x68] sm:$0xff]
      %v292 = vld [vmem:[%s272 + $0x70] sm:$0xff]
      %v293 = vld [vmem:[%s272 + $0x78] sm:$0xff]
      %v294 = vld [vmem:[%s1] sm:$0xf]
      %v295 = vld [vmem:[%s1 + $0x4] sm:$0xf]
      %v296 = vld [vmem:[%s1 + $0x8] sm:$0xf]
      %v297 = vld [vmem:[%s1 + $0xc] sm:$0xf]
      %v298 = vld [vmem:[%s1 + $0x10] sm:$0xf]
      %v299 = vld [vmem:[%s1 + $0x14] sm:$0xf]
      %v300 = vld [vmem:[%s1 + $0x18] sm:$0xf]
      %v301 = vld [vmem:[%s1 + $0x1c] sm:$0xf]
      %v302 = vld [vmem:[%s1 + $0x20] sm:$0xf]
      %v303 = vld [vmem:[%s1 + $0x24] sm:$0xf]
      %v304 = vld [vmem:[%s1 + $0x28] sm:$0xf]
      %v305 = vld [vmem:[%s1 + $0x2c] sm:$0xf]
      %v306 = vld [vmem:[%s1 + $0x30] sm:$0xf]
      %v307 = vld [vmem:[%s1 + $0x34] sm:$0xf]
      %v308 = vld [vmem:[%s1 + $0x38] sm:$0xf]
      %v309 = vld [vmem:[%s1 + $0x3c] sm:$0xf]
      %v310 = vld [vmem:[%s1 + $0x40] sm:$0xf]
      %v311 = vld [vmem:[%s1 + $0x44] sm:$0xf]
      %v312 = vld [vmem:[%s1 + $0x48] sm:$0xf]
      %v313 = vld [vmem:[%s1 + $0x4c] sm:$0xf]
      %v314 = vld [vmem:[%s1 + $0x50] sm:$0xf]
      %v315 = vld [vmem:[%s1 + $0x54] sm:$0xf]
      %v316 = vld [vmem:[%s1 + $0x58] sm:$0xf]
      %v317 = vld [vmem:[%s1 + $0x5c] sm:$0xf]
      %v318 = vld [vmem:[%s1 + $0x60] sm:$0xf]
      %v319 = vld [vmem:[%s1 + $0x64] sm:$0xf]
      %v320 = vld [vmem:[%s1 + $0x68] sm:$0xf]
      %v321 = vld [vmem:[%s1 + $0x6c] sm:$0xf]
      %v322 = vld [vmem:[%s1 + $0x70] sm:$0xf]
      %v323 = vld [vmem:[%s1 + $0x74] sm:$0xf]
      %v324 = vld [vmem:[%s1 + $0x78] sm:$0xf]
      %v325 = vld [vmem:[%s1 + $0x7c] sm:$0xf]
      %v326 = vld [vmem:[%s6] sm:$0x1]
      %v327 = vperm.slane %v326, 0
      %v344 = vunpack.c.l.b16 %v278
      %v345 = vunpack.c.h.b16 %v278
      %v346 = vunpack.c.l.b16 %v279
      %v347 = vunpack.c.h.b16 %v279
      %v348 = vunpack.c.l.b16 %v280
      %v349 = vunpack.c.h.b16 %v280
      %v350 = vunpack.c.l.b16 %v281
      %v351 = vunpack.c.h.b16 %v281
      %v352 = vunpack.c.l.b16 %v282
      %v353 = vunpack.c.h.b16 %v282
      %v354 = vunpack.c.l.b16 %v283
      %v355 = vunpack.c.h.b16 %v283
      %v356 = vunpack.c.l.b16 %v284
      %v357 = vunpack.c.h.b16 %v284
      %v358 = vunpack.c.l.b16 %v285
      %v359 = vunpack.c.h.b16 %v285
      %v360 = vunpack.c.l.b16 %v286
      %v361 = vunpack.c.h.b16 %v286
      %v362 = vunpack.c.l.b16 %v287
      %v363 = vunpack.c.h.b16 %v287
      %v364 = vunpack.c.l.b16 %v288
      %v365 = vunpack.c.h.b16 %v288
      %v366 = vunpack.c.l.b16 %v289
      %v367 = vunpack.c.h.b16 %v289
      %v368 = vunpack.c.l.b16 %v290
      %v369 = vunpack.c.h.b16 %v290
      %v370 = vunpack.c.l.b16 %v291
      %v371 = vunpack.c.h.b16 %v291
      %v372 = vunpack.c.l.b16 %v292
      %v373 = vunpack.c.h.b16 %v292
      %v374 = vunpack.c.l.b16 %v293
      %v375 = vunpack.c.h.b16 %v293
      %v376 = vpack.c.b16 %v346, %v344
      %v377 = vpack.c.b16 %v347, %v345
      %v378 = vpack.c.b16 %v350, %v348
      %v379 = vpack.c.b16 %v351, %v349
      %v380 = vpack.c.b16 %v354, %v352
      %v381 = vpack.c.b16 %v355, %v353
      %v382 = vpack.c.b16 %v358, %v356
      %v383 = vpack.c.b16 %v359, %v357
      %v384 = vpack.c.b16 %v362, %v360
      %v385 = vpack.c.b16 %v363, %v361
      %v386 = vpack.c.b16 %v366, %v364
      %v387 = vpack.c.b16 %v367, %v365
      %v388 = vpack.c.b16 %v370, %v368
      %v389 = vpack.c.b16 %v371, %v369
      %v390 = vpack.c.b16 %v374, %v372
      %v391 = vpack.c.b16 %v375, %v373
      %v440 = vunpack.c.l.b16 %v294
      %v441 = vunpack.c.l.b16 %v295
      %v442 = vunpack.c.l.b16 %v296
      %v443 = vunpack.c.l.b16 %v297
      %v444 = vunpack.c.l.b16 %v298
      %v445 = vunpack.c.l.b16 %v299
      %v446 = vunpack.c.l.b16 %v300
      %v447 = vunpack.c.l.b16 %v301
      %v448 = vunpack.c.l.b16 %v302
      %v449 = vunpack.c.l.b16 %v303
      %v450 = vunpack.c.l.b16 %v304
      %v451 = vunpack.c.l.b16 %v305
      %v452 = vunpack.c.l.b16 %v306
      %v453 = vunpack.c.l.b16 %v307
      %v454 = vunpack.c.l.b16 %v308
      %v455 = vunpack.c.l.b16 %v309
      %v456 = vunpack.c.l.b16 %v310
      %v457 = vunpack.c.l.b16 %v311
      %v458 = vunpack.c.l.b16 %v312
      %v459 = vunpack.c.l.b16 %v313
      %v460 = vunpack.c.l.b16 %v314
      %v461 = vunpack.c.l.b16 %v315
      %v462 = vunpack.c.l.b16 %v316
      %v463 = vunpack.c.l.b16 %v317
      %v464 = vunpack.c.l.b16 %v318
      %v465 = vunpack.c.l.b16 %v319
      %v466 = vunpack.c.l.b16 %v320
      %v467 = vunpack.c.l.b16 %v321
      %v468 = vunpack.c.l.b16 %v322
      %v469 = vunpack.c.l.b16 %v323
      %v470 = vunpack.c.l.b16 %v324
      %v471 = vunpack.c.l.b16 %v325
      %v472 = vpack.c.b16 %v441, %v440
      %v473 = vpack.c.b16 %v443, %v442
      %v474 = vpack.c.b16 %v445, %v444
      %v475 = vpack.c.b16 %v447, %v446
      %v476 = vpack.c.b16 %v449, %v448
      %v477 = vpack.c.b16 %v451, %v450
      %v478 = vpack.c.b16 %v453, %v452
      %v479 = vpack.c.b16 %v455, %v454
      %v480 = vpack.c.b16 %v457, %v456
      %v481 = vpack.c.b16 %v459, %v458
      %v482 = vpack.c.b16 %v461, %v460
      %v483 = vpack.c.b16 %v463, %v462
      %v484 = vpack.c.b16 %v465, %v464
      %v485 = vpack.c.b16 %v467, %v466
      %v486 = vpack.c.b16 %v469, %v468
      %v487 = vpack.c.b16 %v471, %v470
      %504 = vmatpush.bf16.msra.mxu0 %v479
      %505 = vmatpush.bf16.msra.mxu0 %v478
      %506 = vmatpush.bf16.msra.mxu0 %v477
      %507 = vmatpush.bf16.msra.mxu0 %v476
      %508 = vmatpush.bf16.msra.mxu0 %v475
      %509 = vmatpush.bf16.msra.mxu0 %v474
      %510 = vmatpush.bf16.msra.mxu0 %v473
      %511 = vmatpush.bf16.msra.mxu0 %v472
      %512 = vmatmul.bf16.gmra.mxu0 %v376
      %v513 = vpop.f32.mrf.mxu0
      %v514 = vadd.f32 %v327, %v513
      %v515 = vpop.f32.mrf.mxu0
      %v516 = vadd.f32 %v327, %v515
      %517 = vmatmul.bf16.gmra.mxu0 %v378
      %v518 = vpop.f32.mrf.mxu0
      %v519 = vadd.f32 %v327, %v518
      %v520 = vpop.f32.mrf.mxu0
      %v521 = vadd.f32 %v327, %v520
      %522 = vmatmul.bf16.gmra.mxu0 %v380
      %v523 = vpop.f32.mrf.mxu0
      %v524 = vadd.f32 %v327, %v523
      %v525 = vpop.f32.mrf.mxu0
      %v526 = vadd.f32 %v327, %v525
      %527 = vmatmul.bf16.gmra.mxu0 %v382
      %v528 = vpop.f32.mrf.mxu0
      %v529 = vadd.f32 %v327, %v528
      %v530 = vpop.f32.mrf.mxu0
      %v531 = vadd.f32 %v327, %v530
      %532 = vmatmul.bf16.gmra.mxu0 %v384
      %v533 = vpop.f32.mrf.mxu0
      %v534 = vadd.f32 %v327, %v533
      %v535 = vpop.f32.mrf.mxu0
      %v536 = vadd.f32 %v327, %v535
      %537 = vmatmul.bf16.gmra.mxu0 %v386
      %v538 = vpop.f32.mrf.mxu0
      %v539 = vadd.f32 %v327, %v538
      %v540 = vpop.f32.mrf.mxu0
      %v541 = vadd.f32 %v327, %v540
      %542 = vmatmul.bf16.gmra.mxu0 %v388
      %v543 = vpop.f32.mrf.mxu0
      %v544 = vadd.f32 %v327, %v543
      %v545 = vpop.f32.mrf.mxu0
      %v546 = vadd.f32 %v327, %v545
      %547 = vmatmul.bf16.gmra.mxu0 %v390
      %v548 = vpop.f32.mrf.mxu0
      %v549 = vadd.f32 %v327, %v548
      %v550 = vpop.f32.mrf.mxu0
      %v551 = vadd.f32 %v327, %v550
      %552 = vdwg.mxu0
      %553 = vmatpush.bf16.msra.mxu0 %v487
      %554 = vmatpush.bf16.msra.mxu0 %v486
      %555 = vmatpush.bf16.msra.mxu0 %v485
      %556 = vmatpush.bf16.msra.mxu0 %v484
      %557 = vmatpush.bf16.msra.mxu0 %v483
      %558 = vmatpush.bf16.msra.mxu0 %v482
      %559 = vmatpush.bf16.msra.mxu0 %v481
      %560 = vmatpush.bf16.msra.mxu0 %v480
      %561 = vmatmul.bf16.gmra.mxu0 %v377
      %v562 = vpop.f32.mrf.mxu0
      %v563 = vadd.f32 %v514, %v562
      %v564 = vpop.f32.mrf.mxu0
      %v565 = vadd.f32 %v516, %v564
      %566 = vmatmul.bf16.gmra.mxu0 %v379
      %v567 = vpop.f32.mrf.mxu0
      %v568 = vadd.f32 %v519, %v567
      %v569 = vpop.f32.mrf.mxu0
      %v570 = vadd.f32 %v521, %v569
      %571 = vmatmul.bf16.gmra.mxu0 %v381
      %v572 = vpop.f32.mrf.mxu0
      %v573 = vadd.f32 %v524, %v572
      %v574 = vpop.f32.mrf.mxu0
      %v575 = vadd.f32 %v526, %v574
      %576 = vmatmul.bf16.gmra.mxu0 %v383
      %v577 = vpop.f32.mrf.mxu0
      %v578 = vadd.f32 %v529, %v577
      %v579 = vpop.f32.mrf.mxu0
      %v580 = vadd.f32 %v531, %v579
      %581 = vmatmul.bf16.gmra.mxu0 %v385
      %v582 = vpop.f32.mrf.mxu0
      %v583 = vadd.f32 %v534, %v582
      %v584 = vpop.f32.mrf.mxu0
      %v585 = vadd.f32 %v536, %v584
      %586 = vmatmul.bf16.gmra.mxu0 %v387
      %v587 = vpop.f32.mrf.mxu0
      %v588 = vadd.f32 %v539, %v587
      %v589 = vpop.f32.mrf.mxu0
      %v590 = vadd.f32 %v541, %v589
      %591 = vmatmul.bf16.gmra.mxu0 %v389
      %v592 = vpop.f32.mrf.mxu0
      %v593 = vadd.f32 %v544, %v592
      %v594 = vpop.f32.mrf.mxu0
      %v595 = vadd.f32 %v546, %v594
      %596 = vmatmul.bf16.gmra.mxu0 %v391
      %v597 = vpop.f32.mrf.mxu0
      %v598 = vadd.f32 %v549, %v597
      %v599 = vpop.f32.mrf.mxu0
      %v600 = vadd.f32 %v551, %v599
      %601 = vdwg.mxu0
      %vm602 = vcmp.gt.f32.partialorder %v563, 0.0
      %vm603 = vcmp.gt.f32.partialorder %v565, 0.0
      %vm604 = vcmp.gt.f32.partialorder %v568, 0.0
      %vm605 = vcmp.gt.f32.partialorder %v570, 0.0
      %vm606 = vcmp.gt.f32.partialorder %v573, 0.0
      %vm607 = vcmp.gt.f32.partialorder %v575, 0.0
      %vm608 = vcmp.gt.f32.partialorder %v578, 0.0
      %vm609 = vcmp.gt.f32.partialorder %v580, 0.0
      %vm610 = vcmp.gt.f32.partialorder %v583, 0.0
      %vm611 = vcmp.gt.f32.partialorder %v585, 0.0
      %vm612 = vcmp.gt.f32.partialorder %v588, 0.0
      %vm613 = vcmp.gt.f32.partialorder %v590, 0.0
      %vm614 = vcmp.gt.f32.partialorder %v593, 0.0
      %vm615 = vcmp.gt.f32.partialorder %v595, 0.0
      %vm616 = vcmp.gt.f32.partialorder %v598, 0.0
      %vm617 = vcmp.gt.f32.partialorder %v600, 0.0
      %v618 = vmin.f32 %v563, 0.0
      %v619 = vmin.f32 %v565, 0.0
      %v620 = vmin.f32 %v568, 0.0
      %v621 = vmin.f32 %v570, 0.0
      %v622 = vmin.f32 %v573, 0.0
      %v623 = vmin.f32 %v575, 0.0
      %v624 = vmin.f32 %v578, 0.0
      %v625 = vmin.f32 %v580, 0.0
      %v626 = vmin.f32 %v583, 0.0
      %v627 = vmin.f32 %v585, 0.0
      %v628 = vmin.f32 %v588, 0.0
      %v629 = vmin.f32 %v590, 0.0
      %v630 = vmin.f32 %v593, 0.0
      %v631 = vmin.f32 %v595, 0.0
      %v632 = vmin.f32 %v598, 0.0
      %v633 = vmin.f32 %v600, 0.0
      %v634 = vmul.f32 %v618, 1.442695
      %v635 = vpow.pop %v634
      %v636 = vmul.f32 %v619, 1.442695
      %v637 = vpow.pop %v636
      %v638 = vmul.f32 %v620, 1.442695
      %v639 = vpow.pop %v638
      %v640 = vmul.f32 %v621, 1.442695
      %v641 = vpow.pop %v640
      %v642 = vmul.f32 %v622, 1.442695
      %v643 = vpow.pop %v642
      %v644 = vmul.f32 %v623, 1.442695
      %v645 = vpow.pop %v644
      %v646 = vmul.f32 %v624, 1.442695
      %v647 = vpow.pop %v646
      %v648 = vmul.f32 %v625, 1.442695
      %v649 = vpow.pop %v648
      %v650 = vmul.f32 %v626, 1.442695
      %v651 = vpow.pop %v650
      %v652 = vmul.f32 %v627, 1.442695
      %v653 = vpow.pop %v652
      %v654 = vmul.f32 %v628, 1.442695
      %v655 = vpow.pop %v654
      %v656 = vmul.f32 %v629, 1.442695
      %v657 = vpow.pop %v656
      %v658 = vmul.f32 %v630, 1.442695
      %v659 = vpow.pop %v658
      %v660 = vmul.f32 %v631, 1.442695
      %v661 = vpow.pop %v660
      %v662 = vmul.f32 %v632, 1.442695
      %v663 = vpow.pop %v662
      %v664 = vmul.f32 %v633, 1.442695
      %v665 = vpow.pop %v664
      %v666 = vsub.f32 %v635, 1.0
      %v667 = vsub.f32 %v637, 1.0
      %v668 = vsub.f32 %v639, 1.0
      %v669 = vsub.f32 %v641, 1.0
      %v670 = vsub.f32 %v643, 1.0
      %v671 = vsub.f32 %v645, 1.0
      %v672 = vsub.f32 %v647, 1.0
      %v673 = vsub.f32 %v649, 1.0
      %v674 = vsub.f32 %v651, 1.0
      %v675 = vsub.f32 %v653, 1.0
      %v676 = vsub.f32 %v655, 1.0
      %v677 = vsub.f32 %v657, 1.0
      %v678 = vsub.f32 %v659, 1.0
      %v679 = vsub.f32 %v661, 1.0
      %v680 = vsub.f32 %v663, 1.0
      %v681 = vsub.f32 %v665, 1.0
      %v682 = vsel %vm602, %v563, %v666
      %v683 = vsel %vm603, %v565, %v667
      %v684 = vsel %vm604, %v568, %v668
      %v685 = vsel %vm605, %v570, %v669
      %v686 = vsel %vm606, %v573, %v670
      %v687 = vsel %vm607, %v575, %v671
      %v688 = vsel %vm608, %v578, %v672
      %v689 = vsel %vm609, %v580, %v673
      %v690 = vsel %vm610, %v583, %v674
      %v691 = vsel %vm611, %v585, %v675
      %v692 = vsel %vm612, %v588, %v676
      %v693 = vsel %vm613, %v590, %v677
      %v694 = vsel %vm614, %v593, %v678
      %v695 = vsel %vm615, %v595, %v679
      %v696 = vsel %vm616, %v598, %v680
      %v697 = vsel %vm617, %v600, %v681
      %v698 = vld [vmem:[%s2] sm:$0xf]
      %v699 = vld [vmem:[%s2 + $0x4] sm:$0xf]
      %v700 = vld [vmem:[%s2 + $0x8] sm:$0xf]
      %v701 = vld [vmem:[%s2 + $0xc] sm:$0xf]
      %v702 = vld [vmem:[%s2 + $0x10] sm:$0xf]
      %v703 = vld [vmem:[%s2 + $0x14] sm:$0xf]
      %v704 = vld [vmem:[%s2 + $0x18] sm:$0xf]
      %v705 = vld [vmem:[%s2 + $0x1c] sm:$0xf]
      %v706 = vld [vmem:[%s2 + $0x20] sm:$0xf]
      %v707 = vld [vmem:[%s2 + $0x24] sm:$0xf]
      %v708 = vld [vmem:[%s2 + $0x28] sm:$0xf]
      %v709 = vld [vmem:[%s2 + $0x2c] sm:$0xf]
      %v710 = vld [vmem:[%s2 + $0x30] sm:$0xf]
      %v711 = vld [vmem:[%s2 + $0x34] sm:$0xf]
      %v712 = vld [vmem:[%s2 + $0x38] sm:$0xf]
      %v713 = vld [vmem:[%s2 + $0x3c] sm:$0xf]
      %v714 = vld [vmem:[%s2 + $0x40] sm:$0xf]
      %v715 = vld [vmem:[%s2 + $0x44] sm:$0xf]
      %v716 = vld [vmem:[%s2 + $0x48] sm:$0xf]
      %v717 = vld [vmem:[%s2 + $0x4c] sm:$0xf]
      %v718 = vld [vmem:[%s2 + $0x50] sm:$0xf]
      %v719 = vld [vmem:[%s2 + $0x54] sm:$0xf]
      %v720 = vld [vmem:[%s2 + $0x58] sm:$0xf]
      %v721 = vld [vmem:[%s2 + $0x5c] sm:$0xf]
      %v722 = vld [vmem:[%s2 + $0x60] sm:$0xf]
      %v723 = vld [vmem:[%s2 + $0x64] sm:$0xf]
      %v724 = vld [vmem:[%s2 + $0x68] sm:$0xf]
      %v725 = vld [vmem:[%s2 + $0x6c] sm:$0xf]
      %v726 = vld [vmem:[%s2 + $0x70] sm:$0xf]
      %v727 = vld [vmem:[%s2 + $0x74] sm:$0xf]
      %v728 = vld [vmem:[%s2 + $0x78] sm:$0xf]
      %v729 = vld [vmem:[%s2 + $0x7c] sm:$0xf]
      %v730 = vpack.c.bf16 %v683, %v682
      %v731 = vpack.c.bf16 %v685, %v684
      %v732 = vpack.c.bf16 %v687, %v686
      %v733 = vpack.c.bf16 %v689, %v688
      %v734 = vpack.c.bf16 %v691, %v690
      %v735 = vpack.c.bf16 %v693, %v692
      %v736 = vpack.c.bf16 %v695, %v694
      %v737 = vpack.c.bf16 %v697, %v696
      %v770 = vunpack.c.l.b16 %v698
      %v771 = vunpack.c.l.b16 %v699
      %v772 = vunpack.c.l.b16 %v700
      %v773 = vunpack.c.l.b16 %v701
      %v774 = vunpack.c.l.b16 %v702
      %v775 = vunpack.c.l.b16 %v703
      %v776 = vunpack.c.l.b16 %v704
      %v777 = vunpack.c.l.b16 %v705
      %v778 = vunpack.c.l.b16 %v706
      %v779 = vunpack.c.l.b16 %v707
      %v780 = vunpack.c.l.b16 %v708
      %v781 = vunpack.c.l.b16 %v709
      %v782 = vunpack.c.l.b16 %v710
      %v783 = vunpack.c.l.b16 %v711
      %v784 = vunpack.c.l.b16 %v712
      %v785 = vunpack.c.l.b16 %v713
      %v786 = vunpack.c.l.b16 %v714
      %v787 = vunpack.c.l.b16 %v715
      %v788 = vunpack.c.l.b16 %v716
      %v789 = vunpack.c.l.b16 %v717
      %v790 = vunpack.c.l.b16 %v718
      %v791 = vunpack.c.l.b16 %v719
      %v792 = vunpack.c.l.b16 %v720
      %v793 = vunpack.c.l.b16 %v721
      %v794 = vunpack.c.l.b16 %v722
      %v795 = vunpack.c.l.b16 %v723
      %v796 = vunpack.c.l.b16 %v724
      %v797 = vunpack.c.l.b16 %v725
      %v798 = vunpack.c.l.b16 %v726
      %v799 = vunpack.c.l.b16 %v727
      %v800 = vunpack.c.l.b16 %v728
      %v801 = vunpack.c.l.b16 %v729
      %v802 = vpack.c.b16 %v771, %v770
      %v803 = vpack.c.b16 %v773, %v772
      %v804 = vpack.c.b16 %v775, %v774
      %v805 = vpack.c.b16 %v777, %v776
      %v806 = vpack.c.b16 %v779, %v778
      %v807 = vpack.c.b16 %v781, %v780
      %v808 = vpack.c.b16 %v783, %v782
      %v809 = vpack.c.b16 %v785, %v784
      %v810 = vpack.c.b16 %v787, %v786
      %v811 = vpack.c.b16 %v789, %v788
      %v812 = vpack.c.b16 %v791, %v790
      %v813 = vpack.c.b16 %v793, %v792
      %v814 = vpack.c.b16 %v795, %v794
      %v815 = vpack.c.b16 %v797, %v796
      %v816 = vpack.c.b16 %v799, %v798
      %v817 = vpack.c.b16 %v801, %v800
      %834 = vmatpush.bf16.msra.mxu0 %v737
      %835 = vmatpush.bf16.msra.mxu0 %v736
      %836 = vmatpush.bf16.msra.mxu0 %v735
      %837 = vmatpush.bf16.msra.mxu0 %v734
      %838 = vmatpush.bf16.msra.mxu0 %v733
      %839 = vmatpush.bf16.msra.mxu0 %v732
      %840 = vmatpush.bf16.msra.mxu0 %v731
      %841 = vmatpush.bf16.msra.mxu0 %v730
      %842 = vmatmul.bf16.gmra.mxu0 %v802
      %v843 = vpop.f32.mrf.mxu0
      %v844 = vadd.f32 0.0, %v843
      %v845 = vpop.f32.mrf.mxu0
      %v846 = vadd.f32 0.0, %v845
      %847 = vmatmul.bf16.gmra.mxu0 %v803
      %v848 = vpop.f32.mrf.mxu0
      %v849 = vadd.f32 0.0, %v848
      %v850 = vpop.f32.mrf.mxu0
      %v851 = vadd.f32 0.0, %v850
      %852 = vmatmul.bf16.gmra.mxu0 %v804
      %v853 = vpop.f32.mrf.mxu0
      %v854 = vadd.f32 0.0, %v853
      %v855 = vpop.f32.mrf.mxu0
      %v856 = vadd.f32 0.0, %v855
      %857 = vmatmul.bf16.gmra.mxu0 %v805
      %v858 = vpop.f32.mrf.mxu0
      %v859 = vadd.f32 0.0, %v858
      %v860 = vpop.f32.mrf.mxu0
      %v861 = vadd.f32 0.0, %v860
      %862 = vmatmul.bf16.gmra.mxu0 %v806
      %v863 = vpop.f32.mrf.mxu0
      %v864 = vadd.f32 0.0, %v863
      %v865 = vpop.f32.mrf.mxu0
      %v866 = vadd.f32 0.0, %v865
      %867 = vmatmul.bf16.gmra.mxu0 %v807
      %v868 = vpop.f32.mrf.mxu0
      %v869 = vadd.f32 0.0, %v868
      %v870 = vpop.f32.mrf.mxu0
      %v871 = vadd.f32 0.0, %v870
      %872 = vmatmul.bf16.gmra.mxu0 %v808
      %v873 = vpop.f32.mrf.mxu0
      %v874 = vadd.f32 0.0, %v873
      %v875 = vpop.f32.mrf.mxu0
      %v876 = vadd.f32 0.0, %v875
      %877 = vmatmul.bf16.gmra.mxu0 %v809
      %v878 = vpop.f32.mrf.mxu0
      %v879 = vadd.f32 0.0, %v878
      %v880 = vpop.f32.mrf.mxu0
      %v881 = vadd.f32 0.0, %v880
      %882 = vmatmul.bf16.gmra.mxu0 %v810
      %v883 = vpop.f32.mrf.mxu0
      %v884 = vadd.f32 0.0, %v883
      %v885 = vpop.f32.mrf.mxu0
      %v886 = vadd.f32 0.0, %v885
      %887 = vmatmul.bf16.gmra.mxu0 %v811
      %v888 = vpop.f32.mrf.mxu0
      %v889 = vadd.f32 0.0, %v888
      %v890 = vpop.f32.mrf.mxu0
      %v891 = vadd.f32 0.0, %v890
      %892 = vmatmul.bf16.gmra.mxu0 %v812
      %v893 = vpop.f32.mrf.mxu0
      %v894 = vadd.f32 0.0, %v893
      %v895 = vpop.f32.mrf.mxu0
      %v896 = vadd.f32 0.0, %v895
      %897 = vmatmul.bf16.gmra.mxu0 %v813
      %v898 = vpop.f32.mrf.mxu0
      %v899 = vadd.f32 0.0, %v898
      %v900 = vpop.f32.mrf.mxu0
      %v901 = vadd.f32 0.0, %v900
      %902 = vmatmul.bf16.gmra.mxu0 %v814
      %v903 = vpop.f32.mrf.mxu0
      %v904 = vadd.f32 0.0, %v903
      %v905 = vpop.f32.mrf.mxu0
      %v906 = vadd.f32 0.0, %v905
      %907 = vmatmul.bf16.gmra.mxu0 %v815
      %v908 = vpop.f32.mrf.mxu0
      %v909 = vadd.f32 0.0, %v908
      %v910 = vpop.f32.mrf.mxu0
      %v911 = vadd.f32 0.0, %v910
      %912 = vmatmul.bf16.gmra.mxu0 %v816
      %v913 = vpop.f32.mrf.mxu0
      %v914 = vadd.f32 0.0, %v913
      %v915 = vpop.f32.mrf.mxu0
      %v916 = vadd.f32 0.0, %v915
      %917 = vmatmul.bf16.gmra.mxu0 %v817
      %v918 = vpop.f32.mrf.mxu0
      %v919 = vadd.f32 0.0, %v918
      %v920 = vpop.f32.mrf.mxu0
      %v921 = vadd.f32 0.0, %v920
      %922 = vdwg.mxu0
      %v923 = vpack.c.bf16 %v846, %v844
      %v924 = vld [vmem:[%s3] sm:$0xf]
      %v925 = vld [vmem:[%s3 + $0x4] sm:$0xf]
      %v926 = vld [vmem:[%s3 + $0x8] sm:$0xf]
      %v927 = vld [vmem:[%s3 + $0xc] sm:$0xf]
      %v928 = vld [vmem:[%s3 + $0x10] sm:$0xf]
      %v929 = vld [vmem:[%s3 + $0x14] sm:$0xf]
      %v930 = vld [vmem:[%s3 + $0x18] sm:$0xf]
      %v931 = vld [vmem:[%s3 + $0x1c] sm:$0xf]
      %v932 = vld [vmem:[%s3 + $0x20] sm:$0xf]
      %v933 = vld [vmem:[%s3 + $0x24] sm:$0xf]
      %v934 = vld [vmem:[%s3 + $0x28] sm:$0xf]
      %v935 = vld [vmem:[%s3 + $0x2c] sm:$0xf]
      %v936 = vld [vmem:[%s3 + $0x30] sm:$0xf]
      %v937 = vld [vmem:[%s3 + $0x34] sm:$0xf]
      %v938 = vld [vmem:[%s3 + $0x38] sm:$0xf]
      %v939 = vld [vmem:[%s3 + $0x3c] sm:$0xf]
      %v940 = vpack.c.bf16 %v851, %v849
      %s941 = scalar_lea.vmem %s3, 64
      %v942 = vld [vmem:[%s941] sm:$0xf]
      %v943 = vld [vmem:[%s941 + $0x4] sm:$0xf]
      %v944 = vld [vmem:[%s941 + $0x8] sm:$0xf]
      %v945 = vld [vmem:[%s941 + $0xc] sm:$0xf]
      %v946 = vld [vmem:[%s941 + $0x10] sm:$0xf]
      %v947 = vld [vmem:[%s941 + $0x14] sm:$0xf]
      %v948 = vld [vmem:[%s941 + $0x18] sm:$0xf]
      %v949 = vld [vmem:[%s941 + $0x1c] sm:$0xf]
      %v950 = vld [vmem:[%s941 + $0x20] sm:$0xf]
      %v951 = vld [vmem:[%s941 + $0x24] sm:$0xf]
      %v952 = vld [vmem:[%s941 + $0x28] sm:$0xf]
      %v953 = vld [vmem:[%s941 + $0x2c] sm:$0xf]
      %v954 = vld [vmem:[%s941 + $0x30] sm:$0xf]
      %v955 = vld [vmem:[%s941 + $0x34] sm:$0xf]
      %v956 = vld [vmem:[%s941 + $0x38] sm:$0xf]
      %v957 = vld [vmem:[%s941 + $0x3c] sm:$0xf]
      %v974 = vunpack.c.l.b16 %v942
      %v975 = vunpack.c.l.b16 %v943
      %v976 = vunpack.c.l.b16 %v944
      %v977 = vunpack.c.l.b16 %v945
      %v978 = vunpack.c.l.b16 %v946
      %v979 = vunpack.c.l.b16 %v947
      %v980 = vunpack.c.l.b16 %v948
      %v981 = vunpack.c.l.b16 %v949
      %v982 = vunpack.c.l.b16 %v950
      %v983 = vunpack.c.l.b16 %v951
      %v984 = vunpack.c.l.b16 %v952
      %v985 = vunpack.c.l.b16 %v953
      %v986 = vunpack.c.l.b16 %v954
      %v987 = vunpack.c.l.b16 %v955
      %v988 = vunpack.c.l.b16 %v956
      %v989 = vunpack.c.l.b16 %v957
      %v990 = vpack.c.b16 %v975, %v974
      %v991 = vpack.c.b16 %v977, %v976
      %v992 = vpack.c.b16 %v979, %v978
      %v993 = vpack.c.b16 %v981, %v980
      %v994 = vpack.c.b16 %v983, %v982
      %v995 = vpack.c.b16 %v985, %v984
      %v996 = vpack.c.b16 %v987, %v986
      %v997 = vpack.c.b16 %v989, %v988
      %1006 = vmatpush.bf16.msra.mxu0 %v997
      %1007 = vmatpush.bf16.msra.mxu0 %v996
      %1008 = vmatpush.bf16.msra.mxu0 %v995
      %1009 = vmatpush.bf16.msra.mxu0 %v994
      %1010 = vmatpush.bf16.msra.mxu0 %v993
      %1011 = vmatpush.bf16.msra.mxu0 %v992
      %1012 = vmatpush.bf16.msra.mxu0 %v991
      %1013 = vmatpush.bf16.msra.mxu0 %v990
      %1014 = vmatmul.bf16.gmra.mxu0 %v940
      %v1015 = vpop.f32.mrf.mxu0
      %v1016 = vadd.f32 0.0, %v1015
      %v1017 = vpop.f32.mrf.mxu0
      %v1018 = vadd.f32 0.0, %v1017
      %1019 = vdwg.mxu0
      %v1036 = vunpack.c.l.b16 %v924
      %v1037 = vunpack.c.l.b16 %v925
      %v1038 = vunpack.c.l.b16 %v926
      %v1039 = vunpack.c.l.b16 %v927
      %v1040 = vunpack.c.l.b16 %v928
      %v1041 = vunpack.c.l.b16 %v929
      %v1042 = vunpack.c.l.b16 %v930
      %v1043 = vunpack.c.l.b16 %v931
      %v1044 = vunpack.c.l.b16 %v932
      %v1045 = vunpack.c.l.b16 %v933
      %v1046 = vunpack.c.l.b16 %v934
      %v1047 = vunpack.c.l.b16 %v935
      %v1048 = vunpack.c.l.b16 %v936
      %v1049 = vunpack.c.l.b16 %v937
      %v1050 = vunpack.c.l.b16 %v938
      %v1051 = vunpack.c.l.b16 %v939
      %v1052 = vpack.c.b16 %v1037, %v1036
      %v1053 = vpack.c.b16 %v1039, %v1038
      %v1054 = vpack.c.b16 %v1041, %v1040
      %v1055 = vpack.c.b16 %v1043, %v1042
      %v1056 = vpack.c.b16 %v1045, %v1044
      %v1057 = vpack.c.b16 %v1047, %v1046
      %v1058 = vpack.c.b16 %v1049, %v1048
      %v1059 = vpack.c.b16 %v1051, %v1050
      %1068 = vmatpush.bf16.msra.mxu0 %v1059
      %1069 = vmatpush.bf16.msra.mxu0 %v1058
      %1070 = vmatpush.bf16.msra.mxu0 %v1057
      %1071 = vmatpush.bf16.msra.mxu0 %v1056
      %1072 = vmatpush.bf16.msra.mxu0 %v1055
      %1073 = vmatpush.bf16.msra.mxu0 %v1054
      %1074 = vmatpush.bf16.msra.mxu0 %v1053
      %1075 = vmatpush.bf16.msra.mxu0 %v1052
      %1076 = vmatmul.bf16.gmra.mxu0 %v923
      %v1077 = vpop.f32.mrf.mxu0
      %v1078 = vadd.f32 %v1016, %v1077
      %v1079 = vpop.f32.mrf.mxu0
      %v1080 = vadd.f32 %v1018, %v1079
      %1081 = vdwg.mxu0
      %v1082 = vpack.c.bf16 %v856, %v854
      %s1083 = scalar_lea.vmem %s3, 128
      %v1084 = vld [vmem:[%s1083] sm:$0xf]
      %v1085 = vld [vmem:[%s1083 + $0x4] sm:$0xf]
      %v1086 = vld [vmem:[%s1083 + $0x8] sm:$0xf]
      %v1087 = vld [vmem:[%s1083 + $0xc] sm:$0xf]
      %v1088 = vld [vmem:[%s1083 + $0x10] sm:$0xf]
      %v1089 = vld [vmem:[%s1083 + $0x14] sm:$0xf]
      %v1090 = vld [vmem:[%s1083 + $0x18] sm:$0xf]
      %v1091 = vld [vmem:[%s1083 + $0x1c] sm:$0xf]
      %v1092 = vld [vmem:[%s1083 + $0x20] sm:$0xf]
      %v1093 = vld [vmem:[%s1083 + $0x24] sm:$0xf]
      %v1094 = vld [vmem:[%s1083 + $0x28] sm:$0xf]
      %v1095 = vld [vmem:[%s1083 + $0x2c] sm:$0xf]
      %v1096 = vld [vmem:[%s1083 + $0x30] sm:$0xf]
      %v1097 = vld [vmem:[%s1083 + $0x34] sm:$0xf]
      %v1098 = vld [vmem:[%s1083 + $0x38] sm:$0xf]
      %v1099 = vld [vmem:[%s1083 + $0x3c] sm:$0xf]
      %v1116 = vunpack.c.l.b16 %v1084
      %v1117 = vunpack.c.l.b16 %v1085
      %v1118 = vunpack.c.l.b16 %v1086
      %v1119 = vunpack.c.l.b16 %v1087
      %v1120 = vunpack.c.l.b16 %v1088
      %v1121 = vunpack.c.l.b16 %v1089
      %v1122 = vunpack.c.l.b16 %v1090
      %v1123 = vunpack.c.l.b16 %v1091
      %v1124 = vunpack.c.l.b16 %v1092
      %v1125 = vunpack.c.l.b16 %v1093
      %v1126 = vunpack.c.l.b16 %v1094
      %v1127 = vunpack.c.l.b16 %v1095
      %v1128 = vunpack.c.l.b16 %v1096
      %v1129 = vunpack.c.l.b16 %v1097
      %v1130 = vunpack.c.l.b16 %v1098
      %v1131 = vunpack.c.l.b16 %v1099
      %v1132 = vpack.c.b16 %v1117, %v1116
      %v1133 = vpack.c.b16 %v1119, %v1118
      %v1134 = vpack.c.b16 %v1121, %v1120
      %v1135 = vpack.c.b16 %v1123, %v1122
      %v1136 = vpack.c.b16 %v1125, %v1124
      %v1137 = vpack.c.b16 %v1127, %v1126
      %v1138 = vpack.c.b16 %v1129, %v1128
      %v1139 = vpack.c.b16 %v1131, %v1130
      %1148 = vmatpush.bf16.msra.mxu0 %v1139
      %1149 = vmatpush.bf16.msra.mxu0 %v1138
      %1150 = vmatpush.bf16.msra.mxu0 %v1137
      %1151 = vmatpush.bf16.msra.mxu0 %v1136
      %1152 = vmatpush.bf16.msra.mxu0 %v1135
      %1153 = vmatpush.bf16.msra.mxu0 %v1134
      %1154 = vmatpush.bf16.msra.mxu0 %v1133
      %1155 = vmatpush.bf16.msra.mxu0 %v1132
      %1156 = vmatmul.bf16.gmra.mxu0 %v1082
      %v1157 = vpop.f32.mrf.mxu0
      %v1158 = vadd.f32 0.0, %v1157
      %v1159 = vpop.f32.mrf.mxu0
      %v1160 = vadd.f32 0.0, %v1159
      %1161 = vdwg.mxu0
      %v1162 = vadd.f32 %v1078, %v1158
      %v1163 = vadd.f32 %v1080, %v1160
      %v1164 = vpack.c.bf16 %v861, %v859
      %s1165 = scalar_lea.vmem %s3, 192
      %v1166 = vld [vmem:[%s1165] sm:$0xf]
      %v1167 = vld [vmem:[%s1165 + $0x4] sm:$0xf]
      %v1168 = vld [vmem:[%s1165 + $0x8] sm:$0xf]
      %v1169 = vld [vmem:[%s1165 + $0xc] sm:$0xf]
      %v1170 = vld [vmem:[%s1165 + $0x10] sm:$0xf]
      %v1171 = vld [vmem:[%s1165 + $0x14] sm:$0xf]
      %v1172 = vld [vmem:[%s1165 + $0x18] sm:$0xf]
      %v1173 = vld [vmem:[%s1165 + $0x1c] sm:$0xf]
      %v1174 = vld [vmem:[%s1165 + $0x20] sm:$0xf]
      %v1175 = vld [vmem:[%s1165 + $0x24] sm:$0xf]
      %v1176 = vld [vmem:[%s1165 + $0x28] sm:$0xf]
      %v1177 = vld [vmem:[%s1165 + $0x2c] sm:$0xf]
      %v1178 = vld [vmem:[%s1165 + $0x30] sm:$0xf]
      %v1179 = vld [vmem:[%s1165 + $0x34] sm:$0xf]
      %v1180 = vld [vmem:[%s1165 + $0x38] sm:$0xf]
      %v1181 = vld [vmem:[%s1165 + $0x3c] sm:$0xf]
      %v1198 = vunpack.c.l.b16 %v1166
      %v1199 = vunpack.c.l.b16 %v1167
      %v1200 = vunpack.c.l.b16 %v1168
      %v1201 = vunpack.c.l.b16 %v1169
      %v1202 = vunpack.c.l.b16 %v1170
      %v1203 = vunpack.c.l.b16 %v1171
      %v1204 = vunpack.c.l.b16 %v1172
      %v1205 = vunpack.c.l.b16 %v1173
      %v1206 = vunpack.c.l.b16 %v1174
      %v1207 = vunpack.c.l.b16 %v1175
      %v1208 = vunpack.c.l.b16 %v1176
      %v1209 = vunpack.c.l.b16 %v1177
      %v1210 = vunpack.c.l.b16 %v1178
      %v1211 = vunpack.c.l.b16 %v1179
      %v1212 = vunpack.c.l.b16 %v1180
      %v1213 = vunpack.c.l.b16 %v1181
      %v1214 = vpack.c.b16 %v1199, %v1198
      %v1215 = vpack.c.b16 %v1201, %v1200
      %v1216 = vpack.c.b16 %v1203, %v1202
      %v1217 = vpack.c.b16 %v1205, %v1204
      %v1218 = vpack.c.b16 %v1207, %v1206
      %v1219 = vpack.c.b16 %v1209, %v1208
      %v1220 = vpack.c.b16 %v1211, %v1210
      %v1221 = vpack.c.b16 %v1213, %v1212
      %1230 = vmatpush.bf16.msra.mxu0 %v1221
      %1231 = vmatpush.bf16.msra.mxu0 %v1220
      %1232 = vmatpush.bf16.msra.mxu0 %v1219
      %1233 = vmatpush.bf16.msra.mxu0 %v1218
      %1234 = vmatpush.bf16.msra.mxu0 %v1217
      %1235 = vmatpush.bf16.msra.mxu0 %v1216
      %1236 = vmatpush.bf16.msra.mxu0 %v1215
      %1237 = vmatpush.bf16.msra.mxu0 %v1214
      %1238 = vmatmul.bf16.gmra.mxu0 %v1164
      %v1239 = vpop.f32.mrf.mxu0
      %v1240 = vadd.f32 0.0, %v1239
      %v1241 = vpop.f32.mrf.mxu0
      %v1242 = vadd.f32 0.0, %v1241
      %1243 = vdwg.mxu0
      %v1244 = vadd.f32 %v1162, %v1240
      %v1245 = vadd.f32 %v1163, %v1242
      %v1246 = vpack.c.bf16 %v866, %v864
      %s1247 = scalar_lea.vmem %s3, 256
      %v1248 = vld [vmem:[%s1247] sm:$0xf]
      %v1249 = vld [vmem:[%s1247 + $0x4] sm:$0xf]
      %v1250 = vld [vmem:[%s1247 + $0x8] sm:$0xf]
      %v1251 = vld [vmem:[%s1247 + $0xc] sm:$0xf]
      %v1252 = vld [vmem:[%s1247 + $0x10] sm:$0xf]
      %v1253 = vld [vmem:[%s1247 + $0x14] sm:$0xf]
      %v1254 = vld [vmem:[%s1247 + $0x18] sm:$0xf]
      %v1255 = vld [vmem:[%s1247 + $0x1c] sm:$0xf]
      %v1256 = vld [vmem:[%s1247 + $0x20] sm:$0xf]
      %v1257 = vld [vmem:[%s1247 + $0x24] sm:$0xf]
      %v1258 = vld [vmem:[%s1247 + $0x28] sm:$0xf]
      %v1259 = vld [vmem:[%s1247 + $0x2c] sm:$0xf]
      %v1260 = vld [vmem:[%s1247 + $0x30] sm:$0xf]
      %v1261 = vld [vmem:[%s1247 + $0x34] sm:$0xf]
      %v1262 = vld [vmem:[%s1247 + $0x38] sm:$0xf]
      %v1263 = vld [vmem:[%s1247 + $0x3c] sm:$0xf]
      %v1280 = vunpack.c.l.b16 %v1248
      %v1281 = vunpack.c.l.b16 %v1249
      %v1282 = vunpack.c.l.b16 %v1250
      %v1283 = vunpack.c.l.b16 %v1251
      %v1284 = vunpack.c.l.b16 %v1252
      %v1285 = vunpack.c.l.b16 %v1253
      %v1286 = vunpack.c.l.b16 %v1254
      %v1287 = vunpack.c.l.b16 %v1255
      %v1288 = vunpack.c.l.b16 %v1256
      %v1289 = vunpack.c.l.b16 %v1257
      %v1290 = vunpack.c.l.b16 %v1258
      %v1291 = vunpack.c.l.b16 %v1259
      %v1292 = vunpack.c.l.b16 %v1260
      %v1293 = vunpack.c.l.b16 %v1261
      %v1294 = vunpack.c.l.b16 %v1262
      %v1295 = vunpack.c.l.b16 %v1263
      %v1296 = vpack.c.b16 %v1281, %v1280
      %v1297 = vpack.c.b16 %v1283, %v1282
      %v1298 = vpack.c.b16 %v1285, %v1284
      %v1299 = vpack.c.b16 %v1287, %v1286
      %v1300 = vpack.c.b16 %v1289, %v1288
      %v1301 = vpack.c.b16 %v1291, %v1290
      %v1302 = vpack.c.b16 %v1293, %v1292
      %v1303 = vpack.c.b16 %v1295, %v1294
      %1312 = vmatpush.bf16.msra.mxu0 %v1303
      %1313 = vmatpush.bf16.msra.mxu0 %v1302
      %1314 = vmatpush.bf16.msra.mxu0 %v1301
      %1315 = vmatpush.bf16.msra.mxu0 %v1300
      %1316 = vmatpush.bf16.msra.mxu0 %v1299
      %1317 = vmatpush.bf16.msra.mxu0 %v1298
      %1318 = vmatpush.bf16.msra.mxu0 %v1297
      %1319 = vmatpush.bf16.msra.mxu0 %v1296
      %1320 = vmatmul.bf16.gmra.mxu0 %v1246
      %v1321 = vpop.f32.mrf.mxu0
      %v1322 = vadd.f32 0.0, %v1321
      %v1323 = vpop.f32.mrf.mxu0
      %v1324 = vadd.f32 0.0, %v1323
      %1325 = vdwg.mxu0
      %v1326 = vadd.f32 %v1244, %v1322
      %v1327 = vadd.f32 %v1245, %v1324
      %v1328 = vpack.c.bf16 %v871, %v869
      %s1329 = scalar_lea.vmem %s3, 320
      %v1330 = vld [vmem:[%s1329] sm:$0xf]
      %v1331 = vld [vmem:[%s1329 + $0x4] sm:$0xf]
      %v1332 = vld [vmem:[%s1329 + $0x8] sm:$0xf]
      %v1333 = vld [vmem:[%s1329 + $0xc] sm:$0xf]
      %v1334 = vld [vmem:[%s1329 + $0x10] sm:$0xf]
      %v1335 = vld [vmem:[%s1329 + $0x14] sm:$0xf]
      %v1336 = vld [vmem:[%s1329 + $0x18] sm:$0xf]
      %v1337 = vld [vmem:[%s1329 + $0x1c] sm:$0xf]
      %v1338 = vld [vmem:[%s1329 + $0x20] sm:$0xf]
      %v1339 = vld [vmem:[%s1329 + $0x24] sm:$0xf]
      %v1340 = vld [vmem:[%s1329 + $0x28] sm:$0xf]
      %v1341 = vld [vmem:[%s1329 + $0x2c] sm:$0xf]
      %v1342 = vld [vmem:[%s1329 + $0x30] sm:$0xf]
      %v1343 = vld [vmem:[%s1329 + $0x34] sm:$0xf]
      %v1344 = vld [vmem:[%s1329 + $0x38] sm:$0xf]
      %v1345 = vld [vmem:[%s1329 + $0x3c] sm:$0xf]
      %v1362 = vunpack.c.l.b16 %v1330
      %v1363 = vunpack.c.l.b16 %v1331
      %v1364 = vunpack.c.l.b16 %v1332
      %v1365 = vunpack.c.l.b16 %v1333
      %v1366 = vunpack.c.l.b16 %v1334
      %v1367 = vunpack.c.l.b16 %v1335
      %v1368 = vunpack.c.l.b16 %v1336
      %v1369 = vunpack.c.l.b16 %v1337
      %v1370 = vunpack.c.l.b16 %v1338
      %v1371 = vunpack.c.l.b16 %v1339
      %v1372 = vunpack.c.l.b16 %v1340
      %v1373 = vunpack.c.l.b16 %v1341
      %v1374 = vunpack.c.l.b16 %v1342
      %v1375 = vunpack.c.l.b16 %v1343
      %v1376 = vunpack.c.l.b16 %v1344
      %v1377 = vunpack.c.l.b16 %v1345
      %v1378 = vpack.c.b16 %v1363, %v1362
      %v1379 = vpack.c.b16 %v1365, %v1364
      %v1380 = vpack.c.b16 %v1367, %v1366
      %v1381 = vpack.c.b16 %v1369, %v1368
      %v1382 = vpack.c.b16 %v1371, %v1370
      %v1383 = vpack.c.b16 %v1373, %v1372
      %v1384 = vpack.c.b16 %v1375, %v1374
      %v1385 = vpack.c.b16 %v1377, %v1376
      %1394 = vmatpush.bf16.msra.mxu0 %v1385
      %1395 = vmatpush.bf16.msra.mxu0 %v1384
      %1396 = vmatpush.bf16.msra.mxu0 %v1383
      %1397 = vmatpush.bf16.msra.mxu0 %v1382
      %1398 = vmatpush.bf16.msra.mxu0 %v1381
      %1399 = vmatpush.bf16.msra.mxu0 %v1380
      %1400 = vmatpush.bf16.msra.mxu0 %v1379
      %1401 = vmatpush.bf16.msra.mxu0 %v1378
      %1402 = vmatmul.bf16.gmra.mxu0 %v1328
      %v1403 = vpop.f32.mrf.mxu0
      %v1404 = vadd.f32 0.0, %v1403
      %v1405 = vpop.f32.mrf.mxu0
      %v1406 = vadd.f32 0.0, %v1405
      %1407 = vdwg.mxu0
      %v1408 = vadd.f32 %v1326, %v1404
      %v1409 = vadd.f32 %v1327, %v1406
      %v1410 = vpack.c.bf16 %v876, %v874
      %s1411 = scalar_lea.vmem %s3, 384
      %v1412 = vld [vmem:[%s1411] sm:$0xf]
      %v1413 = vld [vmem:[%s1411 + $0x4] sm:$0xf]
      %v1414 = vld [vmem:[%s1411 + $0x8] sm:$0xf]
      %v1415 = vld [vmem:[%s1411 + $0xc] sm:$0xf]
      %v1416 = vld [vmem:[%s1411 + $0x10] sm:$0xf]
      %v1417 = vld [vmem:[%s1411 + $0x14] sm:$0xf]
      %v1418 = vld [vmem:[%s1411 + $0x18] sm:$0xf]
      %v1419 = vld [vmem:[%s1411 + $0x1c] sm:$0xf]
      %v1420 = vld [vmem:[%s1411 + $0x20] sm:$0xf]
      %v1421 = vld [vmem:[%s1411 + $0x24] sm:$0xf]
      %v1422 = vld [vmem:[%s1411 + $0x28] sm:$0xf]
      %v1423 = vld [vmem:[%s1411 + $0x2c] sm:$0xf]
      %v1424 = vld [vmem:[%s1411 + $0x30] sm:$0xf]
      %v1425 = vld [vmem:[%s1411 + $0x34] sm:$0xf]
      %v1426 = vld [vmem:[%s1411 + $0x38] sm:$0xf]
      %v1427 = vld [vmem:[%s1411 + $0x3c] sm:$0xf]
      %v1444 = vunpack.c.l.b16 %v1412
      %v1445 = vunpack.c.l.b16 %v1413
      %v1446 = vunpack.c.l.b16 %v1414
      %v1447 = vunpack.c.l.b16 %v1415
      %v1448 = vunpack.c.l.b16 %v1416
      %v1449 = vunpack.c.l.b16 %v1417
      %v1450 = vunpack.c.l.b16 %v1418
      %v1451 = vunpack.c.l.b16 %v1419
      %v1452 = vunpack.c.l.b16 %v1420
      %v1453 = vunpack.c.l.b16 %v1421
      %v1454 = vunpack.c.l.b16 %v1422
      %v1455 = vunpack.c.l.b16 %v1423
      %v1456 = vunpack.c.l.b16 %v1424
      %v1457 = vunpack.c.l.b16 %v1425
      %v1458 = vunpack.c.l.b16 %v1426
      %v1459 = vunpack.c.l.b16 %v1427
      %v1460 = vpack.c.b16 %v1445, %v1444
      %v1461 = vpack.c.b16 %v1447, %v1446
      %v1462 = vpack.c.b16 %v1449, %v1448
      %v1463 = vpack.c.b16 %v1451, %v1450
      %v1464 = vpack.c.b16 %v1453, %v1452
      %v1465 = vpack.c.b16 %v1455, %v1454
      %v1466 = vpack.c.b16 %v1457, %v1456
      %v1467 = vpack.c.b16 %v1459, %v1458
      %1476 = vmatpush.bf16.msra.mxu0 %v1467
      %1477 = vmatpush.bf16.msra.mxu0 %v1466
      %1478 = vmatpush.bf16.msra.mxu0 %v1465
      %1479 = vmatpush.bf16.msra.mxu0 %v1464
      %1480 = vmatpush.bf16.msra.mxu0 %v1463
      %1481 = vmatpush.bf16.msra.mxu0 %v1462
      %1482 = vmatpush.bf16.msra.mxu0 %v1461
      %1483 = vmatpush.bf16.msra.mxu0 %v1460
      %1484 = vmatmul.bf16.gmra.mxu0 %v1410
      %v1485 = vpop.f32.mrf.mxu0
      %v1486 = vadd.f32 0.0, %v1485
      %v1487 = vpop.f32.mrf.mxu0
      %v1488 = vadd.f32 0.0, %v1487
      %1489 = vdwg.mxu0
      %v1490 = vadd.f32 %v1408, %v1486
      %v1491 = vadd.f32 %v1409, %v1488
      %v1492 = vpack.c.bf16 %v881, %v879
      %s1493 = scalar_lea.vmem %s3, 448
      %v1494 = vld [vmem:[%s1493] sm:$0xf]
      %v1495 = vld [vmem:[%s1493 + $0x4] sm:$0xf]
      %v1496 = vld [vmem:[%s1493 + $0x8] sm:$0xf]
      %v1497 = vld [vmem:[%s1493 + $0xc] sm:$0xf]
      %v1498 = vld [vmem:[%s1493 + $0x10] sm:$0xf]
      %v1499 = vld [vmem:[%s1493 + $0x14] sm:$0xf]
      %v1500 = vld [vmem:[%s1493 + $0x18] sm:$0xf]
      %v1501 = vld [vmem:[%s1493 + $0x1c] sm:$0xf]
      %v1502 = vld [vmem:[%s1493 + $0x20] sm:$0xf]
      %v1503 = vld [vmem:[%s1493 + $0x24] sm:$0xf]
      %v1504 = vld [vmem:[%s1493 + $0x28] sm:$0xf]
      %v1505 = vld [vmem:[%s1493 + $0x2c] sm:$0xf]
      %v1506 = vld [vmem:[%s1493 + $0x30] sm:$0xf]
      %v1507 = vld [vmem:[%s1493 + $0x34] sm:$0xf]
      %v1508 = vld [vmem:[%s1493 + $0x38] sm:$0xf]
      %v1509 = vld [vmem:[%s1493 + $0x3c] sm:$0xf]
      %v1526 = vunpack.c.l.b16 %v1494
      %v1527 = vunpack.c.l.b16 %v1495
      %v1528 = vunpack.c.l.b16 %v1496
      %v1529 = vunpack.c.l.b16 %v1497
      %v1530 = vunpack.c.l.b16 %v1498
      %v1531 = vunpack.c.l.b16 %v1499
      %v1532 = vunpack.c.l.b16 %v1500
      %v1533 = vunpack.c.l.b16 %v1501
      %v1534 = vunpack.c.l.b16 %v1502
      %v1535 = vunpack.c.l.b16 %v1503
      %v1536 = vunpack.c.l.b16 %v1504
      %v1537 = vunpack.c.l.b16 %v1505
      %v1538 = vunpack.c.l.b16 %v1506
      %v1539 = vunpack.c.l.b16 %v1507
      %v1540 = vunpack.c.l.b16 %v1508
      %v1541 = vunpack.c.l.b16 %v1509
      %v1542 = vpack.c.b16 %v1527, %v1526
      %v1543 = vpack.c.b16 %v1529, %v1528
      %v1544 = vpack.c.b16 %v1531, %v1530
      %v1545 = vpack.c.b16 %v1533, %v1532
      %v1546 = vpack.c.b16 %v1535, %v1534
      %v1547 = vpack.c.b16 %v1537, %v1536
      %v1548 = vpack.c.b16 %v1539, %v1538
      %v1549 = vpack.c.b16 %v1541, %v1540
      %1558 = vmatpush.bf16.msra.mxu0 %v1549
      %1559 = vmatpush.bf16.msra.mxu0 %v1548
      %1560 = vmatpush.bf16.msra.mxu0 %v1547
      %1561 = vmatpush.bf16.msra.mxu0 %v1546
      %1562 = vmatpush.bf16.msra.mxu0 %v1545
      %1563 = vmatpush.bf16.msra.mxu0 %v1544
      %1564 = vmatpush.bf16.msra.mxu0 %v1543
      %1565 = vmatpush.bf16.msra.mxu0 %v1542
      %1566 = vmatmul.bf16.gmra.mxu0 %v1492
      %v1567 = vpop.f32.mrf.mxu0
      %v1568 = vadd.f32 0.0, %v1567
      %v1569 = vpop.f32.mrf.mxu0
      %v1570 = vadd.f32 0.0, %v1569
      %1571 = vdwg.mxu0
      %v1572 = vadd.f32 %v1490, %v1568
      %v1573 = vadd.f32 %v1491, %v1570
      %v1574 = vpack.c.bf16 %v886, %v884
      %s1575 = scalar_lea.vmem %s3, 512
      %v1576 = vld [vmem:[%s1575] sm:$0xf]
      %v1577 = vld [vmem:[%s1575 + $0x4] sm:$0xf]
      %v1578 = vld [vmem:[%s1575 + $0x8] sm:$0xf]
      %v1579 = vld [vmem:[%s1575 + $0xc] sm:$0xf]
      %v1580 = vld [vmem:[%s1575 + $0x10] sm:$0xf]
      %v1581 = vld [vmem:[%s1575 + $0x14] sm:$0xf]
      %v1582 = vld [vmem:[%s1575 + $0x18] sm:$0xf]
      %v1583 = vld [vmem:[%s1575 + $0x1c] sm:$0xf]
      %v1584 = vld [vmem:[%s1575 + $0x20] sm:$0xf]
      %v1585 = vld [vmem:[%s1575 + $0x24] sm:$0xf]
      %v1586 = vld [vmem:[%s1575 + $0x28] sm:$0xf]
      %v1587 = vld [vmem:[%s1575 + $0x2c] sm:$0xf]
      %v1588 = vld [vmem:[%s1575 + $0x30] sm:$0xf]
      %v1589 = vld [vmem:[%s1575 + $0x34] sm:$0xf]
      %v1590 = vld [vmem:[%s1575 + $0x38] sm:$0xf]
      %v1591 = vld [vmem:[%s1575 + $0x3c] sm:$0xf]
      %v1608 = vunpack.c.l.b16 %v1576
      %v1609 = vunpack.c.l.b16 %v1577
      %v1610 = vunpack.c.l.b16 %v1578
      %v1611 = vunpack.c.l.b16 %v1579
      %v1612 = vunpack.c.l.b16 %v1580
      %v1613 = vunpack.c.l.b16 %v1581
      %v1614 = vunpack.c.l.b16 %v1582
      %v1615 = vunpack.c.l.b16 %v1583
      %v1616 = vunpack.c.l.b16 %v1584
      %v1617 = vunpack.c.l.b16 %v1585
      %v1618 = vunpack.c.l.b16 %v1586
      %v1619 = vunpack.c.l.b16 %v1587
      %v1620 = vunpack.c.l.b16 %v1588
      %v1621 = vunpack.c.l.b16 %v1589
      %v1622 = vunpack.c.l.b16 %v1590
      %v1623 = vunpack.c.l.b16 %v1591
      %v1624 = vpack.c.b16 %v1609, %v1608
      %v1625 = vpack.c.b16 %v1611, %v1610
      %v1626 = vpack.c.b16 %v1613, %v1612
      %v1627 = vpack.c.b16 %v1615, %v1614
      %v1628 = vpack.c.b16 %v1617, %v1616
      %v1629 = vpack.c.b16 %v1619, %v1618
      %v1630 = vpack.c.b16 %v1621, %v1620
      %v1631 = vpack.c.b16 %v1623, %v1622
      %1640 = vmatpush.bf16.msra.mxu0 %v1631
      %1641 = vmatpush.bf16.msra.mxu0 %v1630
      %1642 = vmatpush.bf16.msra.mxu0 %v1629
      %1643 = vmatpush.bf16.msra.mxu0 %v1628
      %1644 = vmatpush.bf16.msra.mxu0 %v1627
      %1645 = vmatpush.bf16.msra.mxu0 %v1626
      %1646 = vmatpush.bf16.msra.mxu0 %v1625
      %1647 = vmatpush.bf16.msra.mxu0 %v1624
      %1648 = vmatmul.bf16.gmra.mxu0 %v1574
      %v1649 = vpop.f32.mrf.mxu0
      %v1650 = vadd.f32 0.0, %v1649
      %v1651 = vpop.f32.mrf.mxu0
      %v1652 = vadd.f32 0.0, %v1651
      %1653 = vdwg.mxu0
      %v1654 = vadd.f32 %v1572, %v1650
      %v1655 = vadd.f32 %v1573, %v1652
      %v1656 = vpack.c.bf16 %v891, %v889
      %s1657 = scalar_lea.vmem %s3, 576
      %v1658 = vld [vmem:[%s1657] sm:$0xf]
      %v1659 = vld [vmem:[%s1657 + $0x4] sm:$0xf]
      %v1660 = vld [vmem:[%s1657 + $0x8] sm:$0xf]
      %v1661 = vld [vmem:[%s1657 + $0xc] sm:$0xf]
      %v1662 = vld [vmem:[%s1657 + $0x10] sm:$0xf]
      %v1663 = vld [vmem:[%s1657 + $0x14] sm:$0xf]
      %v1664 = vld [vmem:[%s1657 + $0x18] sm:$0xf]
      %v1665 = vld [vmem:[%s1657 + $0x1c] sm:$0xf]
      %v1666 = vld [vmem:[%s1657 + $0x20] sm:$0xf]
      %v1667 = vld [vmem:[%s1657 + $0x24] sm:$0xf]
      %v1668 = vld [vmem:[%s1657 + $0x28] sm:$0xf]
      %v1669 = vld [vmem:[%s1657 + $0x2c] sm:$0xf]
      %v1670 = vld [vmem:[%s1657 + $0x30] sm:$0xf]
      %v1671 = vld [vmem:[%s1657 + $0x34] sm:$0xf]
      %v1672 = vld [vmem:[%s1657 + $0x38] sm:$0xf]
      %v1673 = vld [vmem:[%s1657 + $0x3c] sm:$0xf]
      %v1690 = vunpack.c.l.b16 %v1658
      %v1691 = vunpack.c.l.b16 %v1659
      %v1692 = vunpack.c.l.b16 %v1660
      %v1693 = vunpack.c.l.b16 %v1661
      %v1694 = vunpack.c.l.b16 %v1662
      %v1695 = vunpack.c.l.b16 %v1663
      %v1696 = vunpack.c.l.b16 %v1664
      %v1697 = vunpack.c.l.b16 %v1665
      %v1698 = vunpack.c.l.b16 %v1666
      %v1699 = vunpack.c.l.b16 %v1667
      %v1700 = vunpack.c.l.b16 %v1668
      %v1701 = vunpack.c.l.b16 %v1669
      %v1702 = vunpack.c.l.b16 %v1670
      %v1703 = vunpack.c.l.b16 %v1671
      %v1704 = vunpack.c.l.b16 %v1672
      %v1705 = vunpack.c.l.b16 %v1673
      %v1706 = vpack.c.b16 %v1691, %v1690
      %v1707 = vpack.c.b16 %v1693, %v1692
      %v1708 = vpack.c.b16 %v1695, %v1694
      %v1709 = vpack.c.b16 %v1697, %v1696
      %v1710 = vpack.c.b16 %v1699, %v1698
      %v1711 = vpack.c.b16 %v1701, %v1700
      %v1712 = vpack.c.b16 %v1703, %v1702
      %v1713 = vpack.c.b16 %v1705, %v1704
      %1722 = vmatpush.bf16.msra.mxu0 %v1713
      %1723 = vmatpush.bf16.msra.mxu0 %v1712
      %1724 = vmatpush.bf16.msra.mxu0 %v1711
      %1725 = vmatpush.bf16.msra.mxu0 %v1710
      %1726 = vmatpush.bf16.msra.mxu0 %v1709
      %1727 = vmatpush.bf16.msra.mxu0 %v1708
      %1728 = vmatpush.bf16.msra.mxu0 %v1707
      %1729 = vmatpush.bf16.msra.mxu0 %v1706
      %1730 = vmatmul.bf16.gmra.mxu0 %v1656
      %v1731 = vpop.f32.mrf.mxu0
      %v1732 = vadd.f32 0.0, %v1731
      %v1733 = vpop.f32.mrf.mxu0
      %v1734 = vadd.f32 0.0, %v1733
      %1735 = vdwg.mxu0
      %v1736 = vadd.f32 %v1654, %v1732
      %v1737 = vadd.f32 %v1655, %v1734
      %v1738 = vpack.c.bf16 %v896, %v894
      %s1739 = scalar_lea.vmem %s3, 640
      %v1740 = vld [vmem:[%s1739] sm:$0xf]
      %v1741 = vld [vmem:[%s1739 + $0x4] sm:$0xf]
      %v1742 = vld [vmem:[%s1739 + $0x8] sm:$0xf]
      %v1743 = vld [vmem:[%s1739 + $0xc] sm:$0xf]
      %v1744 = vld [vmem:[%s1739 + $0x10] sm:$0xf]
      %v1745 = vld [vmem:[%s1739 + $0x14] sm:$0xf]
      %v1746 = vld [vmem:[%s1739 + $0x18] sm:$0xf]
      %v1747 = vld [vmem:[%s1739 + $0x1c] sm:$0xf]
      %v1748 = vld [vmem:[%s1739 + $0x20] sm:$0xf]
      %v1749 = vld [vmem:[%s1739 + $0x24] sm:$0xf]
      %v1750 = vld [vmem:[%s1739 + $0x28] sm:$0xf]
      %v1751 = vld [vmem:[%s1739 + $0x2c] sm:$0xf]
      %v1752 = vld [vmem:[%s1739 + $0x30] sm:$0xf]
      %v1753 = vld [vmem:[%s1739 + $0x34] sm:$0xf]
      %v1754 = vld [vmem:[%s1739 + $0x38] sm:$0xf]
      %v1755 = vld [vmem:[%s1739 + $0x3c] sm:$0xf]
      %v1772 = vunpack.c.l.b16 %v1740
      %v1773 = vunpack.c.l.b16 %v1741
      %v1774 = vunpack.c.l.b16 %v1742
      %v1775 = vunpack.c.l.b16 %v1743
      %v1776 = vunpack.c.l.b16 %v1744
      %v1777 = vunpack.c.l.b16 %v1745
      %v1778 = vunpack.c.l.b16 %v1746
      %v1779 = vunpack.c.l.b16 %v1747
      %v1780 = vunpack.c.l.b16 %v1748
      %v1781 = vunpack.c.l.b16 %v1749
      %v1782 = vunpack.c.l.b16 %v1750
      %v1783 = vunpack.c.l.b16 %v1751
      %v1784 = vunpack.c.l.b16 %v1752
      %v1785 = vunpack.c.l.b16 %v1753
      %v1786 = vunpack.c.l.b16 %v1754
      %v1787 = vunpack.c.l.b16 %v1755
      %v1788 = vpack.c.b16 %v1773, %v1772
      %v1789 = vpack.c.b16 %v1775, %v1774
      %v1790 = vpack.c.b16 %v1777, %v1776
      %v1791 = vpack.c.b16 %v1779, %v1778
      %v1792 = vpack.c.b16 %v1781, %v1780
      %v1793 = vpack.c.b16 %v1783, %v1782
      %v1794 = vpack.c.b16 %v1785, %v1784
      %v1795 = vpack.c.b16 %v1787, %v1786
      %1804 = vmatpush.bf16.msra.mxu0 %v1795
      %1805 = vmatpush.bf16.msra.mxu0 %v1794
      %1806 = vmatpush.bf16.msra.mxu0 %v1793
      %1807 = vmatpush.bf16.msra.mxu0 %v1792
      %1808 = vmatpush.bf16.msra.mxu0 %v1791
      %1809 = vmatpush.bf16.msra.mxu0 %v1790
      %1810 = vmatpush.bf16.msra.mxu0 %v1789
      %1811 = vmatpush.bf16.msra.mxu0 %v1788
      %1812 = vmatmul.bf16.gmra.mxu0 %v1738
      %v1813 = vpop.f32.mrf.mxu0
      %v1814 = vadd.f32 0.0, %v1813
      %v1815 = vpop.f32.mrf.mxu0
      %v1816 = vadd.f32 0.0, %v1815
      %1817 = vdwg.mxu0
      %v1818 = vadd.f32 %v1736, %v1814
      %v1819 = vadd.f32 %v1737, %v1816
      %v1820 = vpack.c.bf16 %v901, %v899
      %s1821 = scalar_lea.vmem %s3, 704
      %v1822 = vld [vmem:[%s1821] sm:$0xf]
      %v1823 = vld [vmem:[%s1821 + $0x4] sm:$0xf]
      %v1824 = vld [vmem:[%s1821 + $0x8] sm:$0xf]
      %v1825 = vld [vmem:[%s1821 + $0xc] sm:$0xf]
      %v1826 = vld [vmem:[%s1821 + $0x10] sm:$0xf]
      %v1827 = vld [vmem:[%s1821 + $0x14] sm:$0xf]
      %v1828 = vld [vmem:[%s1821 + $0x18] sm:$0xf]
      %v1829 = vld [vmem:[%s1821 + $0x1c] sm:$0xf]
      %v1830 = vld [vmem:[%s1821 + $0x20] sm:$0xf]
      %v1831 = vld [vmem:[%s1821 + $0x24] sm:$0xf]
      %v1832 = vld [vmem:[%s1821 + $0x28] sm:$0xf]
      %v1833 = vld [vmem:[%s1821 + $0x2c] sm:$0xf]
      %v1834 = vld [vmem:[%s1821 + $0x30] sm:$0xf]
      %v1835 = vld [vmem:[%s1821 + $0x34] sm:$0xf]
      %v1836 = vld [vmem:[%s1821 + $0x38] sm:$0xf]
      %v1837 = vld [vmem:[%s1821 + $0x3c] sm:$0xf]
      %v1854 = vunpack.c.l.b16 %v1822
      %v1855 = vunpack.c.l.b16 %v1823
      %v1856 = vunpack.c.l.b16 %v1824
      %v1857 = vunpack.c.l.b16 %v1825
      %v1858 = vunpack.c.l.b16 %v1826
      %v1859 = vunpack.c.l.b16 %v1827
      %v1860 = vunpack.c.l.b16 %v1828
      %v1861 = vunpack.c.l.b16 %v1829
      %v1862 = vunpack.c.l.b16 %v1830
      %v1863 = vunpack.c.l.b16 %v1831
      %v1864 = vunpack.c.l.b16 %v1832
      %v1865 = vunpack.c.l.b16 %v1833
      %v1866 = vunpack.c.l.b16 %v1834
      %v1867 = vunpack.c.l.b16 %v1835
      %v1868 = vunpack.c.l.b16 %v1836
      %v1869 = vunpack.c.l.b16 %v1837
      %v1870 = vpack.c.b16 %v1855, %v1854
      %v1871 = vpack.c.b16 %v1857, %v1856
      %v1872 = vpack.c.b16 %v1859, %v1858
      %v1873 = vpack.c.b16 %v1861, %v1860
      %v1874 = vpack.c.b16 %v1863, %v1862
      %v1875 = vpack.c.b16 %v1865, %v1864
      %v1876 = vpack.c.b16 %v1867, %v1866
      %v1877 = vpack.c.b16 %v1869, %v1868
      %1886 = vmatpush.bf16.msra.mxu0 %v1877
      %1887 = vmatpush.bf16.msra.mxu0 %v1876
      %1888 = vmatpush.bf16.msra.mxu0 %v1875
      %1889 = vmatpush.bf16.msra.mxu0 %v1874
      %1890 = vmatpush.bf16.msra.mxu0 %v1873
      %1891 = vmatpush.bf16.msra.mxu0 %v1872
      %1892 = vmatpush.bf16.msra.mxu0 %v1871
      %1893 = vmatpush.bf16.msra.mxu0 %v1870
      %1894 = vmatmul.bf16.gmra.mxu0 %v1820
      %v1895 = vpop.f32.mrf.mxu0
      %v1896 = vadd.f32 0.0, %v1895
      %v1897 = vpop.f32.mrf.mxu0
      %v1898 = vadd.f32 0.0, %v1897
      %1899 = vdwg.mxu0
      %v1900 = vadd.f32 %v1818, %v1896
      %v1901 = vadd.f32 %v1819, %v1898
      %v1902 = vpack.c.bf16 %v906, %v904
      %s1903 = scalar_lea.vmem %s3, 768
      %v1904 = vld [vmem:[%s1903] sm:$0xf]
      %v1905 = vld [vmem:[%s1903 + $0x4] sm:$0xf]
      %v1906 = vld [vmem:[%s1903 + $0x8] sm:$0xf]
      %v1907 = vld [vmem:[%s1903 + $0xc] sm:$0xf]
      %v1908 = vld [vmem:[%s1903 + $0x10] sm:$0xf]
      %v1909 = vld [vmem:[%s1903 + $0x14] sm:$0xf]
      %v1910 = vld [vmem:[%s1903 + $0x18] sm:$0xf]
      %v1911 = vld [vmem:[%s1903 + $0x1c] sm:$0xf]
      %v1912 = vld [vmem:[%s1903 + $0x20] sm:$0xf]
      %v1913 = vld [vmem:[%s1903 + $0x24] sm:$0xf]
      %v1914 = vld [vmem:[%s1903 + $0x28] sm:$0xf]
      %v1915 = vld [vmem:[%s1903 + $0x2c] sm:$0xf]
      %v1916 = vld [vmem:[%s1903 + $0x30] sm:$0xf]
      %v1917 = vld [vmem:[%s1903 + $0x34] sm:$0xf]
      %v1918 = vld [vmem:[%s1903 + $0x38] sm:$0xf]
      %v1919 = vld [vmem:[%s1903 + $0x3c] sm:$0xf]
      %v1936 = vunpack.c.l.b16 %v1904
      %v1937 = vunpack.c.l.b16 %v1905
      %v1938 = vunpack.c.l.b16 %v1906
      %v1939 = vunpack.c.l.b16 %v1907
      %v1940 = vunpack.c.l.b16 %v1908
      %v1941 = vunpack.c.l.b16 %v1909
      %v1942 = vunpack.c.l.b16 %v1910
      %v1943 = vunpack.c.l.b16 %v1911
      %v1944 = vunpack.c.l.b16 %v1912
      %v1945 = vunpack.c.l.b16 %v1913
      %v1946 = vunpack.c.l.b16 %v1914
      %v1947 = vunpack.c.l.b16 %v1915
      %v1948 = vunpack.c.l.b16 %v1916
      %v1949 = vunpack.c.l.b16 %v1917
      %v1950 = vunpack.c.l.b16 %v1918
      %v1951 = vunpack.c.l.b16 %v1919
      %v1952 = vpack.c.b16 %v1937, %v1936
      %v1953 = vpack.c.b16 %v1939, %v1938
      %v1954 = vpack.c.b16 %v1941, %v1940
      %v1955 = vpack.c.b16 %v1943, %v1942
      %v1956 = vpack.c.b16 %v1945, %v1944
      %v1957 = vpack.c.b16 %v1947, %v1946
      %v1958 = vpack.c.b16 %v1949, %v1948
      %v1959 = vpack.c.b16 %v1951, %v1950
      %1968 = vmatpush.bf16.msra.mxu0 %v1959
      %1969 = vmatpush.bf16.msra.mxu0 %v1958
      %1970 = vmatpush.bf16.msra.mxu0 %v1957
      %1971 = vmatpush.bf16.msra.mxu0 %v1956
      %1972 = vmatpush.bf16.msra.mxu0 %v1955
      %1973 = vmatpush.bf16.msra.mxu0 %v1954
      %1974 = vmatpush.bf16.msra.mxu0 %v1953
      %1975 = vmatpush.bf16.msra.mxu0 %v1952
      %1976 = vmatmul.bf16.gmra.mxu0 %v1902
      %v1977 = vpop.f32.mrf.mxu0
      %v1978 = vadd.f32 0.0, %v1977
      %v1979 = vpop.f32.mrf.mxu0
      %v1980 = vadd.f32 0.0, %v1979
      %1981 = vdwg.mxu0
      %v1982 = vadd.f32 %v1900, %v1978
      %v1983 = vadd.f32 %v1901, %v1980
      %v1984 = vpack.c.bf16 %v911, %v909
      %s1985 = scalar_lea.vmem %s3, 832
      %v1986 = vld [vmem:[%s1985] sm:$0xf]
      %v1987 = vld [vmem:[%s1985 + $0x4] sm:$0xf]
      %v1988 = vld [vmem:[%s1985 + $0x8] sm:$0xf]
      %v1989 = vld [vmem:[%s1985 + $0xc] sm:$0xf]
      %v1990 = vld [vmem:[%s1985 + $0x10] sm:$0xf]
      %v1991 = vld [vmem:[%s1985 + $0x14] sm:$0xf]
      %v1992 = vld [vmem:[%s1985 + $0x18] sm:$0xf]
      %v1993 = vld [vmem:[%s1985 + $0x1c] sm:$0xf]
      %v1994 = vld [vmem:[%s1985 + $0x20] sm:$0xf]
      %v1995 = vld [vmem:[%s1985 + $0x24] sm:$0xf]
      %v1996 = vld [vmem:[%s1985 + $0x28] sm:$0xf]
      %v1997 = vld [vmem:[%s1985 + $0x2c] sm:$0xf]
      %v1998 = vld [vmem:[%s1985 + $0x30] sm:$0xf]
      %v1999 = vld [vmem:[%s1985 + $0x34] sm:$0xf]
      %v2000 = vld [vmem:[%s1985 + $0x38] sm:$0xf]
      %v2001 = vld [vmem:[%s1985 + $0x3c] sm:$0xf]
      %v2018 = vunpack.c.l.b16 %v1986
      %v2019 = vunpack.c.l.b16 %v1987
      %v2020 = vunpack.c.l.b16 %v1988
      %v2021 = vunpack.c.l.b16 %v1989
      %v2022 = vunpack.c.l.b16 %v1990
      %v2023 = vunpack.c.l.b16 %v1991
      %v2024 = vunpack.c.l.b16 %v1992
      %v2025 = vunpack.c.l.b16 %v1993
      %v2026 = vunpack.c.l.b16 %v1994
      %v2027 = vunpack.c.l.b16 %v1995
      %v2028 = vunpack.c.l.b16 %v1996
      %v2029 = vunpack.c.l.b16 %v1997
      %v2030 = vunpack.c.l.b16 %v1998
      %v2031 = vunpack.c.l.b16 %v1999
      %v2032 = vunpack.c.l.b16 %v2000
      %v2033 = vunpack.c.l.b16 %v2001
      %v2034 = vpack.c.b16 %v2019, %v2018
      %v2035 = vpack.c.b16 %v2021, %v2020
      %v2036 = vpack.c.b16 %v2023, %v2022
      %v2037 = vpack.c.b16 %v2025, %v2024
      %v2038 = vpack.c.b16 %v2027, %v2026
      %v2039 = vpack.c.b16 %v2029, %v2028
      %v2040 = vpack.c.b16 %v2031, %v2030
      %v2041 = vpack.c.b16 %v2033, %v2032
      %2050 = vmatpush.bf16.msra.mxu0 %v2041
      %2051 = vmatpush.bf16.msra.mxu0 %v2040
      %2052 = vmatpush.bf16.msra.mxu0 %v2039
      %2053 = vmatpush.bf16.msra.mxu0 %v2038
      %2054 = vmatpush.bf16.msra.mxu0 %v2037
      %2055 = vmatpush.bf16.msra.mxu0 %v2036
      %2056 = vmatpush.bf16.msra.mxu0 %v2035
      %2057 = vmatpush.bf16.msra.mxu0 %v2034
      %2058 = vmatmul.bf16.gmra.mxu0 %v1984
      %v2059 = vpop.f32.mrf.mxu0
      %v2060 = vadd.f32 0.0, %v2059
      %v2061 = vpop.f32.mrf.mxu0
      %v2062 = vadd.f32 0.0, %v2061
      %2063 = vdwg.mxu0
      %v2064 = vadd.f32 %v1982, %v2060
      %v2065 = vadd.f32 %v1983, %v2062
      %v2066 = vpack.c.bf16 %v916, %v914
      %s2067 = scalar_lea.vmem %s3, 896
      %v2068 = vld [vmem:[%s2067] sm:$0xf]
      %v2069 = vld [vmem:[%s2067 + $0x4] sm:$0xf]
      %v2070 = vld [vmem:[%s2067 + $0x8] sm:$0xf]
      %v2071 = vld [vmem:[%s2067 + $0xc] sm:$0xf]
      %v2072 = vld [vmem:[%s2067 + $0x10] sm:$0xf]
      %v2073 = vld [vmem:[%s2067 + $0x14] sm:$0xf]
      %v2074 = vld [vmem:[%s2067 + $0x18] sm:$0xf]
      %v2075 = vld [vmem:[%s2067 + $0x1c] sm:$0xf]
      %v2076 = vld [vmem:[%s2067 + $0x20] sm:$0xf]
      %v2077 = vld [vmem:[%s2067 + $0x24] sm:$0xf]
      %v2078 = vld [vmem:[%s2067 + $0x28] sm:$0xf]
      %v2079 = vld [vmem:[%s2067 + $0x2c] sm:$0xf]
      %v2080 = vld [vmem:[%s2067 + $0x30] sm:$0xf]
      %v2081 = vld [vmem:[%s2067 + $0x34] sm:$0xf]
      %v2082 = vld [vmem:[%s2067 + $0x38] sm:$0xf]
      %v2083 = vld [vmem:[%s2067 + $0x3c] sm:$0xf]
      %v2100 = vunpack.c.l.b16 %v2068
      %v2101 = vunpack.c.l.b16 %v2069
      %v2102 = vunpack.c.l.b16 %v2070
      %v2103 = vunpack.c.l.b16 %v2071
      %v2104 = vunpack.c.l.b16 %v2072
      %v2105 = vunpack.c.l.b16 %v2073
      %v2106 = vunpack.c.l.b16 %v2074
      %v2107 = vunpack.c.l.b16 %v2075
      %v2108 = vunpack.c.l.b16 %v2076
      %v2109 = vunpack.c.l.b16 %v2077
      %v2110 = vunpack.c.l.b16 %v2078
      %v2111 = vunpack.c.l.b16 %v2079
      %v2112 = vunpack.c.l.b16 %v2080
      %v2113 = vunpack.c.l.b16 %v2081
      %v2114 = vunpack.c.l.b16 %v2082
      %v2115 = vunpack.c.l.b16 %v2083
      %v2116 = vpack.c.b16 %v2101, %v2100
      %v2117 = vpack.c.b16 %v2103, %v2102
      %v2118 = vpack.c.b16 %v2105, %v2104
      %v2119 = vpack.c.b16 %v2107, %v2106
      %v2120 = vpack.c.b16 %v2109, %v2108
      %v2121 = vpack.c.b16 %v2111, %v2110
      %v2122 = vpack.c.b16 %v2113, %v2112
      %v2123 = vpack.c.b16 %v2115, %v2114
      %2132 = vmatpush.bf16.msra.mxu0 %v2123
      %2133 = vmatpush.bf16.msra.mxu0 %v2122
      %2134 = vmatpush.bf16.msra.mxu0 %v2121
      %2135 = vmatpush.bf16.msra.mxu0 %v2120
      %2136 = vmatpush.bf16.msra.mxu0 %v2119
      %2137 = vmatpush.bf16.msra.mxu0 %v2118
      %2138 = vmatpush.bf16.msra.mxu0 %v2117
      %2139 = vmatpush.bf16.msra.mxu0 %v2116
      %2140 = vmatmul.bf16.gmra.mxu0 %v2066
      %v2141 = vpop.f32.mrf.mxu0
      %v2142 = vadd.f32 0.0, %v2141
      %v2143 = vpop.f32.mrf.mxu0
      %v2144 = vadd.f32 0.0, %v2143
      %2145 = vdwg.mxu0
      %v2146 = vadd.f32 %v2064, %v2142
      %v2147 = vadd.f32 %v2065, %v2144
      %v2148 = vpack.c.bf16 %v921, %v919
      %s2149 = scalar_lea.vmem %s3, 960
      %v2150 = vld [vmem:[%s2149] sm:$0xf]
      %v2151 = vld [vmem:[%s2149 + $0x4] sm:$0xf]
      %v2152 = vld [vmem:[%s2149 + $0x8] sm:$0xf]
      %v2153 = vld [vmem:[%s2149 + $0xc] sm:$0xf]
      %v2154 = vld [vmem:[%s2149 + $0x10] sm:$0xf]
      %v2155 = vld [vmem:[%s2149 + $0x14] sm:$0xf]
      %v2156 = vld [vmem:[%s2149 + $0x18] sm:$0xf]
      %v2157 = vld [vmem:[%s2149 + $0x1c] sm:$0xf]
      %v2158 = vld [vmem:[%s2149 + $0x20] sm:$0xf]
      %v2159 = vld [vmem:[%s2149 + $0x24] sm:$0xf]
      %v2160 = vld [vmem:[%s2149 + $0x28] sm:$0xf]
      %v2161 = vld [vmem:[%s2149 + $0x2c] sm:$0xf]
      %v2162 = vld [vmem:[%s2149 + $0x30] sm:$0xf]
      %v2163 = vld [vmem:[%s2149 + $0x34] sm:$0xf]
      %v2164 = vld [vmem:[%s2149 + $0x38] sm:$0xf]
      %v2165 = vld [vmem:[%s2149 + $0x3c] sm:$0xf]
      %v2182 = vunpack.c.l.b16 %v2150
      %v2183 = vunpack.c.l.b16 %v2151
      %v2184 = vunpack.c.l.b16 %v2152
      %v2185 = vunpack.c.l.b16 %v2153
      %v2186 = vunpack.c.l.b16 %v2154
      %v2187 = vunpack.c.l.b16 %v2155
      %v2188 = vunpack.c.l.b16 %v2156
      %v2189 = vunpack.c.l.b16 %v2157
      %v2190 = vunpack.c.l.b16 %v2158
      %v2191 = vunpack.c.l.b16 %v2159
      %v2192 = vunpack.c.l.b16 %v2160
      %v2193 = vunpack.c.l.b16 %v2161
      %v2194 = vunpack.c.l.b16 %v2162
      %v2195 = vunpack.c.l.b16 %v2163
      %v2196 = vunpack.c.l.b16 %v2164
      %v2197 = vunpack.c.l.b16 %v2165
      %v2198 = vpack.c.b16 %v2183, %v2182
      %v2199 = vpack.c.b16 %v2185, %v2184
      %v2200 = vpack.c.b16 %v2187, %v2186
      %v2201 = vpack.c.b16 %v2189, %v2188
      %v2202 = vpack.c.b16 %v2191, %v2190
      %v2203 = vpack.c.b16 %v2193, %v2192
      %v2204 = vpack.c.b16 %v2195, %v2194
      %v2205 = vpack.c.b16 %v2197, %v2196
      %2214 = vmatpush.bf16.msra.mxu0 %v2205
      %2215 = vmatpush.bf16.msra.mxu0 %v2204
      %2216 = vmatpush.bf16.msra.mxu0 %v2203
      %2217 = vmatpush.bf16.msra.mxu0 %v2202
      %2218 = vmatpush.bf16.msra.mxu0 %v2201
      %2219 = vmatpush.bf16.msra.mxu0 %v2200
      %2220 = vmatpush.bf16.msra.mxu0 %v2199
      %2221 = vmatpush.bf16.msra.mxu0 %v2198
      %2222 = vmatmul.bf16.gmra.mxu0 %v2148
      %v2223 = vpop.f32.mrf.mxu0
      %v2224 = vadd.f32 0.0, %v2223
      %v2225 = vpop.f32.mrf.mxu0
      %v2226 = vadd.f32 0.0, %v2225
      %2227 = vdwg.mxu0
      %v2228 = vadd.f32 %v2146, %v2224
      %v2229 = vadd.f32 %v2147, %v2226
      %v2230 = vld [vmem:[%s6 + $0x1] sm:$0x1]
      %v2231 = vperm.slane %v2230, 0
      %v2232 = vadd.f32 %v2228, %v2231
      %v2233 = vadd.f32 %v2229, %v2231
      %vm2234 = vcmp.gt.f32.partialorder %v2232, 0.0
      %vm2235 = vcmp.gt.f32.partialorder %v2233, 0.0
      %v2236 = vmin.f32 %v2232, 0.0
      %v2237 = vmin.f32 %v2233, 0.0
      %v2238 = vmul.f32 %v2236, 1.442695
      %v2239 = vpow.pop %v2238
      %v2240 = vmul.f32 %v2237, 1.442695
      %v2241 = vpow.pop %v2240
      %v2242 = vsub.f32 %v2239, 1.0
      %v2243 = vsub.f32 %v2241, 1.0
      %v2244 = vsel %vm2234, %v2232, %v2242
      %v2245 = vsel %vm2235, %v2233, %v2243
      %v2246 = vld [vmem:[%s4] sm:$0xf]
      %v2247 = vld [vmem:[%s4 + $0x4] sm:$0xf]
      %v2248 = vld [vmem:[%s4 + $0x8] sm:$0xf]
      %v2249 = vld [vmem:[%s4 + $0xc] sm:$0xf]
      %v2250 = vld [vmem:[%s4 + $0x10] sm:$0xf]
      %v2251 = vld [vmem:[%s4 + $0x14] sm:$0xf]
      %v2252 = vld [vmem:[%s4 + $0x18] sm:$0xf]
      %v2253 = vld [vmem:[%s4 + $0x1c] sm:$0xf]
      %v2254 = vld [vmem:[%s4 + $0x20] sm:$0xf]
      %v2255 = vpack.c.bf16 %v2245, %v2244
      %v2265 = vunpack.c.l.b16 %v2246
      %v2266 = vunpack.c.l.b16 %v2247
      %v2267 = vunpack.c.l.b16 %v2248
      %v2268 = vunpack.c.l.b16 %v2249
      %v2269 = vunpack.c.l.b16 %v2250
      %v2270 = vunpack.c.l.b16 %v2251
      %v2271 = vunpack.c.l.b16 %v2252
      %v2272 = vunpack.c.l.b16 %v2253
      %v2273 = vunpack.c.l.b16 %v2254
      %v2274 = vpack.c.b16 %v2266, %v2265
      %v2275 = vpack.c.b16 %v2268, %v2267
      %v2276 = vpack.c.b16 %v2270, %v2269
      %v2277 = vpack.c.b16 %v2272, %v2271
      %v2278 = vpack.c.b16 %v2273, %v2273
      %vm2279 = vcmask 130048
      %v2281 = vsel %vm2279, %v2274, 0
      %v2284 = vsel %vm2279, %v2275, 0
      %v2287 = vsel %vm2279, %v2276, 0
      %v2290 = vsel %vm2279, %v2277, 0
      %v2293 = vsel %vm2279, %v2278, 0
      %2295 = vmatpush.bf16.msra.mxu0 0
      %2296 = vmatpush.bf16.msra.mxu0 0
      %2297 = vmatpush.bf16.msra.mxu0 0
      %2298 = vmatpush.bf16.msra.mxu0 0
      %2299 = vmatpush.bf16.msra.mxu0 0
      %2300 = vmatpush.bf16.msra.mxu0 0
      %2301 = vmatpush.bf16.msra.mxu0 0
      %2302 = vmatpush.bf16.msra.mxu0 %v2255
      %2303 = vmatmul.bf16.gmra.mxu0 %v2281
      %v2304 = vpop.f32.mrf.mxu0
      %v2305 = vadd.f32 0.0, %v2304
      %v2306 = vpop.f32.mrf.mxu0
      %v2307 = vadd.f32 0.0, %v2306
      %2308 = vmatmul.bf16.gmra.mxu0 %v2284
      %v2309 = vpop.f32.mrf.mxu0
      %v2310 = vadd.f32 0.0, %v2309
      %v2311 = vpop.f32.mrf.mxu0
      %v2312 = vadd.f32 0.0, %v2311
      %2313 = vmatmul.bf16.gmra.mxu0 %v2287
      %v2314 = vpop.f32.mrf.mxu0
      %v2315 = vadd.f32 0.0, %v2314
      %v2316 = vpop.f32.mrf.mxu0
      %v2317 = vadd.f32 0.0, %v2316
      %2318 = vmatmul.bf16.gmra.mxu0 %v2290
      %v2319 = vpop.f32.mrf.mxu0
      %v2320 = vadd.f32 0.0, %v2319
      %v2321 = vpop.f32.mrf.mxu0
      %v2322 = vadd.f32 0.0, %v2321
      %2323 = vmatmul.bf16.gmra.mxu0 %v2293
      %v2324 = vpop.f32.mrf.mxu0
      %v2325 = vadd.f32 0.0, %v2324
      %v2326 = vpop.f32.mrf.mxu0
      %2327 = vdwg.mxu0
      %v2328 = vpack.c.bf16 %v2305, %v2305
      %v2329 = vld [vmem:[%s5] sm:$0xf]
      %v2330 = vld [vmem:[%s5 + $0x4] sm:$0xf]
      %v2331 = vld [vmem:[%s5 + $0x8] sm:$0xf]
      %v2332 = vld [vmem:[%s5 + $0xc] sm:$0xf]
      %v2333 = vld [vmem:[%s5 + $0x10] sm:$0xf]
      %v2334 = vld [vmem:[%s5 + $0x14] sm:$0xf]
      %v2335 = vld [vmem:[%s5 + $0x18] sm:$0xf]
      %v2336 = vld [vmem:[%s5 + $0x1c] sm:$0xf]
      %v2337 = vld [vmem:[%s5 + $0x20] sm:$0xf]
      %v2338 = vld [vmem:[%s5 + $0x24] sm:$0xf]
      %v2339 = vld [vmem:[%s5 + $0x28] sm:$0xf]
      %v2340 = vld [vmem:[%s5 + $0x2c] sm:$0xf]
      %v2341 = vld [vmem:[%s5 + $0x30] sm:$0xf]
      %v2342 = vld [vmem:[%s5 + $0x34] sm:$0xf]
      %v2343 = vld [vmem:[%s5 + $0x38] sm:$0xf]
      %v2344 = vld [vmem:[%s5 + $0x3c] sm:$0xf]
      %v2345 = vpack.c.bf16 %v2307, %v2307
      %s2346 = scalar_lea.vmem %s5, 64
      %v2347 = vld [vmem:[%s2346] sm:$0xf]
      %v2348 = vld [vmem:[%s2346 + $0x4] sm:$0xf]
      %v2349 = vld [vmem:[%s2346 + $0x8] sm:$0xf]
      %v2350 = vld [vmem:[%s2346 + $0xc] sm:$0xf]
      %v2351 = vld [vmem:[%s2346 + $0x10] sm:$0xf]
      %v2352 = vld [vmem:[%s2346 + $0x14] sm:$0xf]
      %v2353 = vld [vmem:[%s2346 + $0x18] sm:$0xf]
      %v2354 = vld [vmem:[%s2346 + $0x1c] sm:$0xf]
      %v2355 = vld [vmem:[%s2346 + $0x20] sm:$0xf]
      %v2356 = vld [vmem:[%s2346 + $0x24] sm:$0xf]
      %v2357 = vld [vmem:[%s2346 + $0x28] sm:$0xf]
      %v2358 = vld [vmem:[%s2346 + $0x2c] sm:$0xf]
      %v2359 = vld [vmem:[%s2346 + $0x30] sm:$0xf]
      %v2360 = vld [vmem:[%s2346 + $0x34] sm:$0xf]
      %v2361 = vld [vmem:[%s2346 + $0x38] sm:$0xf]
      %v2362 = vld [vmem:[%s2346 + $0x3c] sm:$0xf]
      %v2379 = vunpack.c.l.b16 %v2347
      %v2380 = vunpack.c.l.b16 %v2348
      %v2381 = vunpack.c.l.b16 %v2349
      %v2382 = vunpack.c.l.b16 %v2350
      %v2383 = vunpack.c.l.b16 %v2351
      %v2384 = vunpack.c.l.b16 %v2352
      %v2385 = vunpack.c.l.b16 %v2353
      %v2386 = vunpack.c.l.b16 %v2354
      %v2387 = vunpack.c.l.b16 %v2355
      %v2388 = vunpack.c.l.b16 %v2356
      %v2389 = vunpack.c.l.b16 %v2357
      %v2390 = vunpack.c.l.b16 %v2358
      %v2391 = vunpack.c.l.b16 %v2359
      %v2392 = vunpack.c.l.b16 %v2360
      %v2393 = vunpack.c.l.b16 %v2361
      %v2394 = vunpack.c.l.b16 %v2362
      %v2395 = vpack.c.b16 %v2380, %v2379
      %v2396 = vpack.c.b16 %v2382, %v2381
      %v2397 = vpack.c.b16 %v2384, %v2383
      %v2398 = vpack.c.b16 %v2386, %v2385
      %v2399 = vpack.c.b16 %v2388, %v2387
      %v2400 = vpack.c.b16 %v2390, %v2389
      %v2401 = vpack.c.b16 %v2392, %v2391
      %v2402 = vpack.c.b16 %v2394, %v2393
      %2411 = vmatpush.bf16.msra.mxu0 %v2402
      %2412 = vmatpush.bf16.msra.mxu0 %v2401
      %2413 = vmatpush.bf16.msra.mxu0 %v2400
      %2414 = vmatpush.bf16.msra.mxu0 %v2399
      %2415 = vmatpush.bf16.msra.mxu0 %v2398
      %2416 = vmatpush.bf16.msra.mxu0 %v2397
      %2417 = vmatpush.bf16.msra.mxu0 %v2396
      %2418 = vmatpush.bf16.msra.mxu0 %v2395
      %2419 = vmatmul.bf16.gmra.mxu0 %v2345
      %v2420 = vpop.f32.mrf.mxu0
      %v2421 = vadd.f32 0.0, %v2420
      %v2422 = vpop.f32.mrf.mxu0
      %2423 = vdwg.mxu0
      %v2440 = vunpack.c.l.b16 %v2329
      %v2441 = vunpack.c.l.b16 %v2330
      %v2442 = vunpack.c.l.b16 %v2331
      %v2443 = vunpack.c.l.b16 %v2332
      %v2444 = vunpack.c.l.b16 %v2333
      %v2445 = vunpack.c.l.b16 %v2334
      %v2446 = vunpack.c.l.b16 %v2335
      %v2447 = vunpack.c.l.b16 %v2336
      %v2448 = vunpack.c.l.b16 %v2337
      %v2449 = vunpack.c.l.b16 %v2338
      %v2450 = vunpack.c.l.b16 %v2339
      %v2451 = vunpack.c.l.b16 %v2340
      %v2452 = vunpack.c.l.b16 %v2341
      %v2453 = vunpack.c.l.b16 %v2342
      %v2454 = vunpack.c.l.b16 %v2343
      %v2455 = vunpack.c.l.b16 %v2344
      %v2456 = vpack.c.b16 %v2441, %v2440
      %v2457 = vpack.c.b16 %v2443, %v2442
      %v2458 = vpack.c.b16 %v2445, %v2444
      %v2459 = vpack.c.b16 %v2447, %v2446
      %v2460 = vpack.c.b16 %v2449, %v2448
      %v2461 = vpack.c.b16 %v2451, %v2450
      %v2462 = vpack.c.b16 %v2453, %v2452
      %v2463 = vpack.c.b16 %v2455, %v2454
      %2472 = vmatpush.bf16.msra.mxu0 %v2463
      %2473 = vmatpush.bf16.msra.mxu0 %v2462
      %2474 = vmatpush.bf16.msra.mxu0 %v2461
      %2475 = vmatpush.bf16.msra.mxu0 %v2460
      %2476 = vmatpush.bf16.msra.mxu0 %v2459
      %2477 = vmatpush.bf16.msra.mxu0 %v2458
      %2478 = vmatpush.bf16.msra.mxu0 %v2457
      %2479 = vmatpush.bf16.msra.mxu0 %v2456
      %2480 = vmatmul.bf16.gmra.mxu0 %v2328
      %v2481 = vpop.f32.mrf.mxu0
      %v2482 = vadd.f32 %v2421, %v2481
      %v2483 = vpop.f32.mrf.mxu0
      %2484 = vdwg.mxu0
      %v2485 = vpack.c.bf16 %v2310, %v2310
      %s2486 = scalar_lea.vmem %s5, 128
      %v2487 = vld [vmem:[%s2486] sm:$0xf]
      %v2488 = vld [vmem:[%s2486 + $0x4] sm:$0xf]
      %v2489 = vld [vmem:[%s2486 + $0x8] sm:$0xf]
      %v2490 = vld [vmem:[%s2486 + $0xc] sm:$0xf]
      %v2491 = vld [vmem:[%s2486 + $0x10] sm:$0xf]
      %v2492 = vld [vmem:[%s2486 + $0x14] sm:$0xf]
      %v2493 = vld [vmem:[%s2486 + $0x18] sm:$0xf]
      %v2494 = vld [vmem:[%s2486 + $0x1c] sm:$0xf]
      %v2495 = vld [vmem:[%s2486 + $0x20] sm:$0xf]
      %v2496 = vld [vmem:[%s2486 + $0x24] sm:$0xf]
      %v2497 = vld [vmem:[%s2486 + $0x28] sm:$0xf]
      %v2498 = vld [vmem:[%s2486 + $0x2c] sm:$0xf]
      %v2499 = vld [vmem:[%s2486 + $0x30] sm:$0xf]
      %v2500 = vld [vmem:[%s2486 + $0x34] sm:$0xf]
      %v2501 = vld [vmem:[%s2486 + $0x38] sm:$0xf]
      %v2502 = vld [vmem:[%s2486 + $0x3c] sm:$0xf]
      %v2519 = vunpack.c.l.b16 %v2487
      %v2520 = vunpack.c.l.b16 %v2488
      %v2521 = vunpack.c.l.b16 %v2489
      %v2522 = vunpack.c.l.b16 %v2490
      %v2523 = vunpack.c.l.b16 %v2491
      %v2524 = vunpack.c.l.b16 %v2492
      %v2525 = vunpack.c.l.b16 %v2493
      %v2526 = vunpack.c.l.b16 %v2494
      %v2527 = vunpack.c.l.b16 %v2495
      %v2528 = vunpack.c.l.b16 %v2496
      %v2529 = vunpack.c.l.b16 %v2497
      %v2530 = vunpack.c.l.b16 %v2498
      %v2531 = vunpack.c.l.b16 %v2499
      %v2532 = vunpack.c.l.b16 %v2500
      %v2533 = vunpack.c.l.b16 %v2501
      %v2534 = vunpack.c.l.b16 %v2502
      %v2535 = vpack.c.b16 %v2520, %v2519
      %v2536 = vpack.c.b16 %v2522, %v2521
      %v2537 = vpack.c.b16 %v2524, %v2523
      %v2538 = vpack.c.b16 %v2526, %v2525
      %v2539 = vpack.c.b16 %v2528, %v2527
      %v2540 = vpack.c.b16 %v2530, %v2529
      %v2541 = vpack.c.b16 %v2532, %v2531
      %v2542 = vpack.c.b16 %v2534, %v2533
      %2551 = vmatpush.bf16.msra.mxu0 %v2542
      %2552 = vmatpush.bf16.msra.mxu0 %v2541
      %2553 = vmatpush.bf16.msra.mxu0 %v2540
      %2554 = vmatpush.bf16.msra.mxu0 %v2539
      %2555 = vmatpush.bf16.msra.mxu0 %v2538
      %2556 = vmatpush.bf16.msra.mxu0 %v2537
      %2557 = vmatpush.bf16.msra.mxu0 %v2536
      %2558 = vmatpush.bf16.msra.mxu0 %v2535
      %2559 = vmatmul.bf16.gmra.mxu0 %v2485
      %v2560 = vpop.f32.mrf.mxu0
      %v2561 = vadd.f32 0.0, %v2560
      %v2562 = vpop.f32.mrf.mxu0
      %2563 = vdwg.mxu0
      %v2564 = vadd.f32 %v2482, %v2561
      %v2565 = vpack.c.bf16 %v2312, %v2312
      %s2566 = scalar_lea.vmem %s5, 192
      %v2567 = vld [vmem:[%s2566] sm:$0xf]
      %v2568 = vld [vmem:[%s2566 + $0x4] sm:$0xf]
      %v2569 = vld [vmem:[%s2566 + $0x8] sm:$0xf]
      %v2570 = vld [vmem:[%s2566 + $0xc] sm:$0xf]
      %v2571 = vld [vmem:[%s2566 + $0x10] sm:$0xf]
      %v2572 = vld [vmem:[%s2566 + $0x14] sm:$0xf]
      %v2573 = vld [vmem:[%s2566 + $0x18] sm:$0xf]
      %v2574 = vld [vmem:[%s2566 + $0x1c] sm:$0xf]
      %v2575 = vld [vmem:[%s2566 + $0x20] sm:$0xf]
      %v2576 = vld [vmem:[%s2566 + $0x24] sm:$0xf]
      %v2577 = vld [vmem:[%s2566 + $0x28] sm:$0xf]
      %v2578 = vld [vmem:[%s2566 + $0x2c] sm:$0xf]
      %v2579 = vld [vmem:[%s2566 + $0x30] sm:$0xf]
      %v2580 = vld [vmem:[%s2566 + $0x34] sm:$0xf]
      %v2581 = vld [vmem:[%s2566 + $0x38] sm:$0xf]
      %v2582 = vld [vmem:[%s2566 + $0x3c] sm:$0xf]
      %v2599 = vunpack.c.l.b16 %v2567
      %v2600 = vunpack.c.l.b16 %v2568
      %v2601 = vunpack.c.l.b16 %v2569
      %v2602 = vunpack.c.l.b16 %v2570
      %v2603 = vunpack.c.l.b16 %v2571
      %v2604 = vunpack.c.l.b16 %v2572
      %v2605 = vunpack.c.l.b16 %v2573
      %v2606 = vunpack.c.l.b16 %v2574
      %v2607 = vunpack.c.l.b16 %v2575
      %v2608 = vunpack.c.l.b16 %v2576
      %v2609 = vunpack.c.l.b16 %v2577
      %v2610 = vunpack.c.l.b16 %v2578
      %v2611 = vunpack.c.l.b16 %v2579
      %v2612 = vunpack.c.l.b16 %v2580
      %v2613 = vunpack.c.l.b16 %v2581
      %v2614 = vunpack.c.l.b16 %v2582
      %v2615 = vpack.c.b16 %v2600, %v2599
      %v2616 = vpack.c.b16 %v2602, %v2601
      %v2617 = vpack.c.b16 %v2604, %v2603
      %v2618 = vpack.c.b16 %v2606, %v2605
      %v2619 = vpack.c.b16 %v2608, %v2607
      %v2620 = vpack.c.b16 %v2610, %v2609
      %v2621 = vpack.c.b16 %v2612, %v2611
      %v2622 = vpack.c.b16 %v2614, %v2613
      %2631 = vmatpush.bf16.msra.mxu0 %v2622
      %2632 = vmatpush.bf16.msra.mxu0 %v2621
      %2633 = vmatpush.bf16.msra.mxu0 %v2620
      %2634 = vmatpush.bf16.msra.mxu0 %v2619
      %2635 = vmatpush.bf16.msra.mxu0 %v2618
      %2636 = vmatpush.bf16.msra.mxu0 %v2617
      %2637 = vmatpush.bf16.msra.mxu0 %v2616
      %2638 = vmatpush.bf16.msra.mxu0 %v2615
      %2639 = vmatmul.bf16.gmra.mxu0 %v2565
      %v2640 = vpop.f32.mrf.mxu0
      %v2641 = vadd.f32 0.0, %v2640
      %v2642 = vpop.f32.mrf.mxu0
      %2643 = vdwg.mxu0
      %v2644 = vadd.f32 %v2564, %v2641
      %v2645 = vpack.c.bf16 %v2315, %v2315
      %s2646 = scalar_lea.vmem %s5, 256
      %v2647 = vld [vmem:[%s2646] sm:$0xf]
      %v2648 = vld [vmem:[%s2646 + $0x4] sm:$0xf]
      %v2649 = vld [vmem:[%s2646 + $0x8] sm:$0xf]
      %v2650 = vld [vmem:[%s2646 + $0xc] sm:$0xf]
      %v2651 = vld [vmem:[%s2646 + $0x10] sm:$0xf]
      %v2652 = vld [vmem:[%s2646 + $0x14] sm:$0xf]
      %v2653 = vld [vmem:[%s2646 + $0x18] sm:$0xf]
      %v2654 = vld [vmem:[%s2646 + $0x1c] sm:$0xf]
      %v2655 = vld [vmem:[%s2646 + $0x20] sm:$0xf]
      %v2656 = vld [vmem:[%s2646 + $0x24] sm:$0xf]
      %v2657 = vld [vmem:[%s2646 + $0x28] sm:$0xf]
      %v2658 = vld [vmem:[%s2646 + $0x2c] sm:$0xf]
      %v2659 = vld [vmem:[%s2646 + $0x30] sm:$0xf]
      %v2660 = vld [vmem:[%s2646 + $0x34] sm:$0xf]
      %v2661 = vld [vmem:[%s2646 + $0x38] sm:$0xf]
      %v2662 = vld [vmem:[%s2646 + $0x3c] sm:$0xf]
      %v2679 = vunpack.c.l.b16 %v2647
      %v2680 = vunpack.c.l.b16 %v2648
      %v2681 = vunpack.c.l.b16 %v2649
      %v2682 = vunpack.c.l.b16 %v2650
      %v2683 = vunpack.c.l.b16 %v2651
      %v2684 = vunpack.c.l.b16 %v2652
      %v2685 = vunpack.c.l.b16 %v2653
      %v2686 = vunpack.c.l.b16 %v2654
      %v2687 = vunpack.c.l.b16 %v2655
      %v2688 = vunpack.c.l.b16 %v2656
      %v2689 = vunpack.c.l.b16 %v2657
      %v2690 = vunpack.c.l.b16 %v2658
      %v2691 = vunpack.c.l.b16 %v2659
      %v2692 = vunpack.c.l.b16 %v2660
      %v2693 = vunpack.c.l.b16 %v2661
      %v2694 = vunpack.c.l.b16 %v2662
      %v2695 = vpack.c.b16 %v2680, %v2679
      %v2696 = vpack.c.b16 %v2682, %v2681
      %v2697 = vpack.c.b16 %v2684, %v2683
      %v2698 = vpack.c.b16 %v2686, %v2685
      %v2699 = vpack.c.b16 %v2688, %v2687
      %v2700 = vpack.c.b16 %v2690, %v2689
      %v2701 = vpack.c.b16 %v2692, %v2691
      %v2702 = vpack.c.b16 %v2694, %v2693
      %2711 = vmatpush.bf16.msra.mxu0 %v2702
      %2712 = vmatpush.bf16.msra.mxu0 %v2701
      %2713 = vmatpush.bf16.msra.mxu0 %v2700
      %2714 = vmatpush.bf16.msra.mxu0 %v2699
      %2715 = vmatpush.bf16.msra.mxu0 %v2698
      %2716 = vmatpush.bf16.msra.mxu0 %v2697
      %2717 = vmatpush.bf16.msra.mxu0 %v2696
      %2718 = vmatpush.bf16.msra.mxu0 %v2695
      %2719 = vmatmul.bf16.gmra.mxu0 %v2645
      %v2720 = vpop.f32.mrf.mxu0
      %v2721 = vadd.f32 0.0, %v2720
      %v2722 = vpop.f32.mrf.mxu0
      %2723 = vdwg.mxu0
      %v2724 = vadd.f32 %v2644, %v2721
      %v2725 = vpack.c.bf16 %v2317, %v2317
      %s2726 = scalar_lea.vmem %s5, 320
      %v2727 = vld [vmem:[%s2726] sm:$0xf]
      %v2728 = vld [vmem:[%s2726 + $0x4] sm:$0xf]
      %v2729 = vld [vmem:[%s2726 + $0x8] sm:$0xf]
      %v2730 = vld [vmem:[%s2726 + $0xc] sm:$0xf]
      %v2731 = vld [vmem:[%s2726 + $0x10] sm:$0xf]
      %v2732 = vld [vmem:[%s2726 + $0x14] sm:$0xf]
      %v2733 = vld [vmem:[%s2726 + $0x18] sm:$0xf]
      %v2734 = vld [vmem:[%s2726 + $0x1c] sm:$0xf]
      %v2735 = vld [vmem:[%s2726 + $0x20] sm:$0xf]
      %v2736 = vld [vmem:[%s2726 + $0x24] sm:$0xf]
      %v2737 = vld [vmem:[%s2726 + $0x28] sm:$0xf]
      %v2738 = vld [vmem:[%s2726 + $0x2c] sm:$0xf]
      %v2739 = vld [vmem:[%s2726 + $0x30] sm:$0xf]
      %v2740 = vld [vmem:[%s2726 + $0x34] sm:$0xf]
      %v2741 = vld [vmem:[%s2726 + $0x38] sm:$0xf]
      %v2742 = vld [vmem:[%s2726 + $0x3c] sm:$0xf]
      %v2759 = vunpack.c.l.b16 %v2727
      %v2760 = vunpack.c.l.b16 %v2728
      %v2761 = vunpack.c.l.b16 %v2729
      %v2762 = vunpack.c.l.b16 %v2730
      %v2763 = vunpack.c.l.b16 %v2731
      %v2764 = vunpack.c.l.b16 %v2732
      %v2765 = vunpack.c.l.b16 %v2733
      %v2766 = vunpack.c.l.b16 %v2734
      %v2767 = vunpack.c.l.b16 %v2735
      %v2768 = vunpack.c.l.b16 %v2736
      %v2769 = vunpack.c.l.b16 %v2737
      %v2770 = vunpack.c.l.b16 %v2738
      %v2771 = vunpack.c.l.b16 %v2739
      %v2772 = vunpack.c.l.b16 %v2740
      %v2773 = vunpack.c.l.b16 %v2741
      %v2774 = vunpack.c.l.b16 %v2742
      %v2775 = vpack.c.b16 %v2760, %v2759
      %v2776 = vpack.c.b16 %v2762, %v2761
      %v2777 = vpack.c.b16 %v2764, %v2763
      %v2778 = vpack.c.b16 %v2766, %v2765
      %v2779 = vpack.c.b16 %v2768, %v2767
      %v2780 = vpack.c.b16 %v2770, %v2769
      %v2781 = vpack.c.b16 %v2772, %v2771
      %v2782 = vpack.c.b16 %v2774, %v2773
      %2791 = vmatpush.bf16.msra.mxu0 %v2782
      %2792 = vmatpush.bf16.msra.mxu0 %v2781
      %2793 = vmatpush.bf16.msra.mxu0 %v2780
      %2794 = vmatpush.bf16.msra.mxu0 %v2779
      %2795 = vmatpush.bf16.msra.mxu0 %v2778
      %2796 = vmatpush.bf16.msra.mxu0 %v2777
      %2797 = vmatpush.bf16.msra.mxu0 %v2776
      %2798 = vmatpush.bf16.msra.mxu0 %v2775
      %2799 = vmatmul.bf16.gmra.mxu0 %v2725
      %v2800 = vpop.f32.mrf.mxu0
      %v2801 = vadd.f32 0.0, %v2800
      %v2802 = vpop.f32.mrf.mxu0
      %2803 = vdwg.mxu0
      %v2804 = vadd.f32 %v2724, %v2801
      %v2805 = vpack.c.bf16 %v2320, %v2320
      %s2806 = scalar_lea.vmem %s5, 384
      %v2807 = vld [vmem:[%s2806] sm:$0xf]
      %v2808 = vld [vmem:[%s2806 + $0x4] sm:$0xf]
      %v2809 = vld [vmem:[%s2806 + $0x8] sm:$0xf]
      %v2810 = vld [vmem:[%s2806 + $0xc] sm:$0xf]
      %v2811 = vld [vmem:[%s2806 + $0x10] sm:$0xf]
      %v2812 = vld [vmem:[%s2806 + $0x14] sm:$0xf]
      %v2813 = vld [vmem:[%s2806 + $0x18] sm:$0xf]
      %v2814 = vld [vmem:[%s2806 + $0x1c] sm:$0xf]
      %v2815 = vld [vmem:[%s2806 + $0x20] sm:$0xf]
      %v2816 = vld [vmem:[%s2806 + $0x24] sm:$0xf]
      %v2817 = vld [vmem:[%s2806 + $0x28] sm:$0xf]
      %v2818 = vld [vmem:[%s2806 + $0x2c] sm:$0xf]
      %v2819 = vld [vmem:[%s2806 + $0x30] sm:$0xf]
      %v2820 = vld [vmem:[%s2806 + $0x34] sm:$0xf]
      %v2821 = vld [vmem:[%s2806 + $0x38] sm:$0xf]
      %v2822 = vld [vmem:[%s2806 + $0x3c] sm:$0xf]
      %v2839 = vunpack.c.l.b16 %v2807
      %v2840 = vunpack.c.l.b16 %v2808
      %v2841 = vunpack.c.l.b16 %v2809
      %v2842 = vunpack.c.l.b16 %v2810
      %v2843 = vunpack.c.l.b16 %v2811
      %v2844 = vunpack.c.l.b16 %v2812
      %v2845 = vunpack.c.l.b16 %v2813
      %v2846 = vunpack.c.l.b16 %v2814
      %v2847 = vunpack.c.l.b16 %v2815
      %v2848 = vunpack.c.l.b16 %v2816
      %v2849 = vunpack.c.l.b16 %v2817
      %v2850 = vunpack.c.l.b16 %v2818
      %v2851 = vunpack.c.l.b16 %v2819
      %v2852 = vunpack.c.l.b16 %v2820
      %v2853 = vunpack.c.l.b16 %v2821
      %v2854 = vunpack.c.l.b16 %v2822
      %v2855 = vpack.c.b16 %v2840, %v2839
      %v2856 = vpack.c.b16 %v2842, %v2841
      %v2857 = vpack.c.b16 %v2844, %v2843
      %v2858 = vpack.c.b16 %v2846, %v2845
      %v2859 = vpack.c.b16 %v2848, %v2847
      %v2860 = vpack.c.b16 %v2850, %v2849
      %v2861 = vpack.c.b16 %v2852, %v2851
      %v2862 = vpack.c.b16 %v2854, %v2853
      %2871 = vmatpush.bf16.msra.mxu0 %v2862
      %2872 = vmatpush.bf16.msra.mxu0 %v2861
      %2873 = vmatpush.bf16.msra.mxu0 %v2860
      %2874 = vmatpush.bf16.msra.mxu0 %v2859
      %2875 = vmatpush.bf16.msra.mxu0 %v2858
      %2876 = vmatpush.bf16.msra.mxu0 %v2857
      %2877 = vmatpush.bf16.msra.mxu0 %v2856
      %2878 = vmatpush.bf16.msra.mxu0 %v2855
      %2879 = vmatmul.bf16.gmra.mxu0 %v2805
      %v2880 = vpop.f32.mrf.mxu0
      %v2881 = vadd.f32 0.0, %v2880
      %v2882 = vpop.f32.mrf.mxu0
      %2883 = vdwg.mxu0
      %v2884 = vadd.f32 %v2804, %v2881
      %v2885 = vpack.c.bf16 %v2322, %v2322
      %s2886 = scalar_lea.vmem %s5, 448
      %v2887 = vld [vmem:[%s2886] sm:$0xf]
      %v2888 = vld [vmem:[%s2886 + $0x4] sm:$0xf]
      %v2889 = vld [vmem:[%s2886 + $0x8] sm:$0xf]
      %v2890 = vld [vmem:[%s2886 + $0xc] sm:$0xf]
      %v2891 = vld [vmem:[%s2886 + $0x10] sm:$0xf]
      %v2892 = vld [vmem:[%s2886 + $0x14] sm:$0xf]
      %v2893 = vld [vmem:[%s2886 + $0x18] sm:$0xf]
      %v2894 = vld [vmem:[%s2886 + $0x1c] sm:$0xf]
      %v2895 = vld [vmem:[%s2886 + $0x20] sm:$0xf]
      %v2896 = vld [vmem:[%s2886 + $0x24] sm:$0xf]
      %v2897 = vld [vmem:[%s2886 + $0x28] sm:$0xf]
      %v2898 = vld [vmem:[%s2886 + $0x2c] sm:$0xf]
      %v2899 = vld [vmem:[%s2886 + $0x30] sm:$0xf]
      %v2900 = vld [vmem:[%s2886 + $0x34] sm:$0xf]
      %v2901 = vld [vmem:[%s2886 + $0x38] sm:$0xf]
      %v2902 = vld [vmem:[%s2886 + $0x3c] sm:$0xf]
      %v2919 = vunpack.c.l.b16 %v2887
      %v2920 = vunpack.c.l.b16 %v2888
      %v2921 = vunpack.c.l.b16 %v2889
      %v2922 = vunpack.c.l.b16 %v2890
      %v2923 = vunpack.c.l.b16 %v2891
      %v2924 = vunpack.c.l.b16 %v2892
      %v2925 = vunpack.c.l.b16 %v2893
      %v2926 = vunpack.c.l.b16 %v2894
      %v2927 = vunpack.c.l.b16 %v2895
      %v2928 = vunpack.c.l.b16 %v2896
      %v2929 = vunpack.c.l.b16 %v2897
      %v2930 = vunpack.c.l.b16 %v2898
      %v2931 = vunpack.c.l.b16 %v2899
      %v2932 = vunpack.c.l.b16 %v2900
      %v2933 = vunpack.c.l.b16 %v2901
      %v2934 = vunpack.c.l.b16 %v2902
      %v2935 = vpack.c.b16 %v2920, %v2919
      %v2936 = vpack.c.b16 %v2922, %v2921
      %v2937 = vpack.c.b16 %v2924, %v2923
      %v2938 = vpack.c.b16 %v2926, %v2925
      %v2939 = vpack.c.b16 %v2928, %v2927
      %v2940 = vpack.c.b16 %v2930, %v2929
      %v2941 = vpack.c.b16 %v2932, %v2931
      %v2942 = vpack.c.b16 %v2934, %v2933
      %2951 = vmatpush.bf16.msra.mxu0 %v2942
      %2952 = vmatpush.bf16.msra.mxu0 %v2941
      %2953 = vmatpush.bf16.msra.mxu0 %v2940
      %2954 = vmatpush.bf16.msra.mxu0 %v2939
      %2955 = vmatpush.bf16.msra.mxu0 %v2938
      %2956 = vmatpush.bf16.msra.mxu0 %v2937
      %2957 = vmatpush.bf16.msra.mxu0 %v2936
      %2958 = vmatpush.bf16.msra.mxu0 %v2935
      %2959 = vmatmul.bf16.gmra.mxu0 %v2885
      %v2960 = vpop.f32.mrf.mxu0
      %v2961 = vadd.f32 0.0, %v2960
      %v2962 = vpop.f32.mrf.mxu0
      %2963 = vdwg.mxu0
      %v2964 = vadd.f32 %v2884, %v2961
      %v2965 = vpack.c.bf16 %v2325, %v2325
      %s2966 = scalar_lea.vmem %s5, 512
      %v2967 = vld [vmem:[%s2966] sm:$0xf]
      %v2968 = vld [vmem:[%s2966 + $0x4] sm:$0xf]
      %v2969 = vld [vmem:[%s2966 + $0x8] sm:$0xf]
      %v2970 = vld [vmem:[%s2966 + $0xc] sm:$0xf]
      %v2971 = vld [vmem:[%s2966 + $0x10] sm:$0xf]
      %v2972 = vld [vmem:[%s2966 + $0x14] sm:$0xf]
      %v2973 = vld [vmem:[%s2966 + $0x18] sm:$0xf]
      %v2974 = vld [vmem:[%s2966 + $0x1c] sm:$0xf]
      %v2975 = vld [vmem:[%s2966 + $0x20] sm:$0xf]
      %v2976 = vld [vmem:[%s2966 + $0x24] sm:$0xf]
      %v2977 = vld [vmem:[%s2966 + $0x28] sm:$0xf]
      %v2978 = vld [vmem:[%s2966 + $0x2c] sm:$0xf]
      %v2979 = vld [vmem:[%s2966 + $0x30] sm:$0xf]
      %v2980 = vld [vmem:[%s2966 + $0x34] sm:$0xf]
      %v2981 = vld [vmem:[%s2966 + $0x38] sm:$0xf]
      %v2982 = vld [vmem:[%s2966 + $0x3c] sm:$0xf]
      %v2999 = vunpack.c.l.b16 %v2967
      %v3000 = vunpack.c.l.b16 %v2968
      %v3001 = vunpack.c.l.b16 %v2969
      %v3002 = vunpack.c.l.b16 %v2970
      %v3003 = vunpack.c.l.b16 %v2971
      %v3004 = vunpack.c.l.b16 %v2972
      %v3005 = vunpack.c.l.b16 %v2973
      %v3006 = vunpack.c.l.b16 %v2974
      %v3007 = vunpack.c.l.b16 %v2975
      %v3008 = vunpack.c.l.b16 %v2976
      %v3009 = vunpack.c.l.b16 %v2977
      %v3010 = vunpack.c.l.b16 %v2978
      %v3011 = vunpack.c.l.b16 %v2979
      %v3012 = vunpack.c.l.b16 %v2980
      %v3013 = vunpack.c.l.b16 %v2981
      %v3014 = vunpack.c.l.b16 %v2982
      %v3015 = vpack.c.b16 %v3000, %v2999
      %v3016 = vpack.c.b16 %v3002, %v3001
      %v3017 = vpack.c.b16 %v3004, %v3003
      %v3018 = vpack.c.b16 %v3006, %v3005
      %v3019 = vpack.c.b16 %v3008, %v3007
      %v3020 = vpack.c.b16 %v3010, %v3009
      %v3021 = vpack.c.b16 %v3012, %v3011
      %v3022 = vpack.c.b16 %v3014, %v3013
      %3031 = vmatpush.bf16.msra.mxu0 %v3022
      %3032 = vmatpush.bf16.msra.mxu0 %v3021
      %3033 = vmatpush.bf16.msra.mxu0 %v3020
      %3034 = vmatpush.bf16.msra.mxu0 %v3019
      %3035 = vmatpush.bf16.msra.mxu0 %v3018
      %3036 = vmatpush.bf16.msra.mxu0 %v3017
      %3037 = vmatpush.bf16.msra.mxu0 %v3016
      %3038 = vmatpush.bf16.msra.mxu0 %v3015
      %3039 = vmatmul.bf16.gmra.mxu0 %v2965
      %v3040 = vpop.f32.mrf.mxu0
      %v3041 = vadd.f32 0.0, %v3040
      %v3042 = vpop.f32.mrf.mxu0
      %3043 = vdwg.mxu0
      %v3044 = vadd.f32 %v2964, %v3041
      %v3045 = vld [vmem:[%s6 + $0x2] sm:$0x1]
      %v3046 = vperm.slane %v3045, 0
      %v3047 = vadd.f32 %v3044, %v3046
      %vm3048 = vcmp.gt.f32.partialorder %v3047, 0.0
      %v3049 = vmin.f32 %v3047, 0.0
      %v3050 = vmul.f32 %v3049, 1.442695
      %v3051 = vpow.pop %v3050
      %v3052 = vsub.f32 %v3051, 1.0
      %v3053 = vsel %vm3048, %v3047, %v3052
      %3054 = vst [vmem:[%s276] sm:$0xff] %v3053
      %p3055 = scmp.lt.s32.totalorder %s18, 1
      %s3056 = scalar_select %p3055, %s18, 1
      %s3057 = smul.addr %s3056, 8
      %s3058 = scalar_lea.vmem %s7, %s3057
      // Predicated region
      $region49: #{forward.1} parent=47 // pred_check
        %p3059 = pneg %p188
      $region50: #{forward.1} parent=47 // pred_check_branch
        %3061 = sbr.rel (%p3059) target = $region52
      $region51: #{forward.1} parent=47 // pred_region
        _
      $region52: #{forward.1} parent=47 // pred_fallthru
        _
    $region48: #{forward.1} parent=5 // pred_fallthru
      _
    %p3062 = scmp.le.s32.totalorder 2, %s13
    // Predicated region
    $region53: #{forward.1} parent=5 // pred_check
      %p3063 = pneg %p3062
    $region54: #{forward.1} parent=5 // pred_check_branch
      %3065 = sbr.rel (%p3063) target = $region56
    $region55: #{forward.1} parent=5 // pred_region
      %s3066 = ssub.s32 %s13, 2
      // Predicated region
      $region57: #{forward.1} parent=55 // pred_check
        %p3067 = pneg %p194
      $region58: #{forward.1} parent=55 // pred_check_branch
        %3069 = sbr.rel (%p3067) target = $region60
      $region59: #{forward.1} parent=55 // pred_region
        %p3070 = scmp.lt.s32.totalorder %s19, 1
        %s3071 = scalar_select %p3070, %s19, 1
        %s3072 = smul.addr %s3071, 8
        %s3073 = scalar_lea.vmem %s7, %s3072
      $region60: #{forward.1} parent=55 // pred_fallthru
        _
    $region56: #{forward.1} parent=5 // pred_fallthru
      _
  $region6: #{forward.1} parent=0 // loop_footer
    %s17 = sadd.s32 1, %s13
  $region7: #{forward.1} parent=0 // loop_footer_branch
    %12 = sbr.rel target = $region3
  $region8: #{forward.1} parent=0 // loop_exit
    _

</llo_original>
